<compile_context>
chip_gen: v7x
topology: tpu7x:2x2x1
jax: 0.10.0
libtpu: 0.0.40
codegen_flags: <defaults>
</compile_context>

<pallas_src>
import functools

import jax
import jax.numpy as jnp
from jax import lax
from jax.experimental import pallas as pl
from jax.experimental.pallas import tpu as pltpu


def _round_up(x, m):
    return ((x + m - 1) // m) * m


# ----------------------------- Pallas kernel -------------------------------
def actor_kernel(x_ref, avail_ref, h0_ref, w_ref, b_ref, prob_ref, hout_ref,
                 *, T, TT, H_P, matmul_dtype):
    s = pl.program_id(0)

    D = x_ref.shape[-1]        # padded input dim   (multiple of 128)
    A = avail_ref.shape[-1]    # padded action dim  (multiple of 128)
    H = H_P                    # padded hidden dim  (multiple of 128)

    # Initial hidden state -> resident output buffer. The constant index_map
    # keeps hout_ref in VMEM across the whole grid; HBM writeback happens once
    # at grid end (accumulator pattern). Do NOT change the h_T out_spec
    # index_map or the input_output_aliases without revisiting this.
    @pl.when(s == 0)
    def _():
        hout_ref[...] = h0_ref[...]

    # Packed weight slab is already in the matmul dtype -> no per-step casts.
    w1 = w_ref[0:D, 0:H]                    # [D, H]       fc1
    w_g = w_ref[D:D + 2 * H, :]             # [2H, 4H]     [a1 | h] -> gates
    w2 = w_ref[D + 2 * H:D + 3 * H, 0:A]    # [H, A]       fc2
    b1 = b_ref[0:1, 0:H]                    # f32 biases
    b_g = b_ref[1:2, :]
    b2 = b_ref[2:3, 0:A]

    def step(tt, carry):
        t_global = s * TT + tt
        h = hout_ref[...]                                      # [B, H] f32
        x = x_ref[tt]                                          # [B, D] matmul dt

        # ---- fc1 + ReLU (f32 accumulation) ----
        a1 = jnp.dot(x, w1, preferred_element_type=jnp.float32) + b1
        a1 = jnp.maximum(a1, 0.0)

        # ---- GRUCell: one fused gate matmul [r | z | i_n | h_n] ----
        ah = jnp.concatenate(
            [a1.astype(matmul_dtype), h.astype(matmul_dtype)], axis=-1)
        g = jnp.dot(ah, w_g, preferred_element_type=jnp.float32) + b_g

        r = jax.nn.sigmoid(g[:, 0:H])            # lane-aligned gate slices
        z = jax.nn.sigmoid(g[:, H:2 * H])
        n = jnp.tanh(g[:, 2 * H:3 * H] + r * g[:, 3 * H:4 * H])
        h_new = (1.0 - z) * n + z * h                          # [B, H] f32

        # ---- fc2 + availability mask + softmax (lane-dense f32 output) ----
        logits = jnp.dot(h_new.astype(matmul_dtype), w2,
                         preferred_element_type=jnp.float32) + b2
        logits = jnp.where(avail_ref[tt] == 0, -1e10, logits)
        m = jnp.max(logits, axis=-1, keepdims=True)
        e = jnp.exp(logits - m)
        ssum = jnp.sum(e, axis=-1, keepdims=True)
        prob_ref[tt] = e * pl.reciprocal(ssum, approx=False)   # exact: sums to 1

        # Padded timesteps (t >= T, only when T % TT != 0) must not advance
        # the recurrence; their prob rows are discarded in the wrapper.
        hout_ref[...] = jnp.where(t_global < T, h_new, h)
        return carry

    lax.fori_loop(0, TT, step, 0, unroll=True)


# ------------------------------ wrapper -------------------------------------
@functools.partial(jax.jit, static_argnames=("matmul_dtype", "time_block"))
def actor_rollout(x_seq, avail_seq, h0, w_slab, b_slab, *,
                  matmul_dtype=jnp.bfloat16, time_block=32):
    """Run the Actor forward for T steps.
    x_seq [T,B,D], avail_seq [T,B,A], h0 [B,H], (w_slab, b_slab) from
    pack_params(..., matmul_dtype).  Returns (prob [T,B,A] f32, h_T [B,H] f32)."""
    T, B, D = x_seq.shape
    A = avail_seq.shape[-1]
    H = h0.shape[-1]
    D_P, H_P, A_P = _round_up(D, 128), _round_up(H, 128), _round_up(A, 128)
    G = 4 * H_P
    B_P = _round_up(B, 8)

    assert w_slab.shape == (D_P + 3 * H_P, G) and w_slab.dtype == matmul_dtype
    assert b_slab.shape == (8, G) and b_slab.dtype == jnp.float32

    TT = min(time_block, T)
    T_P = _round_up(T, TT)
    n_blocks = T_P // TT

    # Pad feature dims to 128 lanes (exact: padded hidden lanes stay 0, padded
    # action lanes are masked to -1e10 before softmax) and batch to 8 sublanes.
    # x / avail are streamed in the matmul dtype to halve input HBM traffic.
    x_p = jnp.zeros((T_P, B_P, D_P), matmul_dtype).at[:T, :B, :D].set(
        x_seq.astype(matmul_dtype))
    av_p = jnp.zeros((T_P, B_P, A_P), matmul_dtype).at[:T, :B, :A].set(
        avail_seq.astype(matmul_dtype))
    h0_p = jnp.zeros((B_P, H_P), jnp.float32).at[:B, :H].set(h0)

    itemsize = jnp.dtype(matmul_dtype).itemsize
    flops = 2 * T * B_P * (D_P * H_P + 2 * H_P * G + H_P * A_P)
    transcendentals = T * B_P * (3 * H_P + A_P)
    bytes_accessed = (x_p.size * itemsize + av_p.size * itemsize
                      + h0_p.size * 4 + w_slab.size * itemsize + b_slab.size * 4
                      + T_P * B_P * A_P * 4 + B_P * H_P * 4)

    # VMEM footprint: double-buffered pipelined blocks + (double-buffered)
    # constant-index slabs + h buffers.  Stay well under the 64 MiB v7x budget.
    vmem_need = (2 * TT * B_P * (D_P + A_P) * itemsize      # x, avail blocks
                 + 2 * TT * B_P * A_P * 4                    # prob blocks
                 + 2 * (w_slab.size * itemsize + b_slab.size * 4)
                 + 4 * B_P * H_P * 4)
    vmem_limit = int(min(max(vmem_need + (8 << 20), 32 << 20), 64 << 20))

    kernel = functools.partial(actor_kernel, T=T, TT=TT, H_P=H_P,
                               matmul_dtype=matmul_dtype)

    prob_p, h_out_p = pl.pallas_call(
        kernel,
        grid=(n_blocks,),
        in_specs=[
            pl.BlockSpec((TT, B_P, D_P), lambda s: (s, 0, 0)),   # x block
            pl.BlockSpec((TT, B_P, A_P), lambda s: (s, 0, 0)),   # avail block
            pl.BlockSpec((B_P, H_P), lambda s: (0, 0)),          # h0 (once)
            pl.BlockSpec(w_slab.shape, lambda s: (0, 0)),        # weights (once)
            pl.BlockSpec(b_slab.shape, lambda s: (0, 0)),        # biases (once)
        ],
        out_specs=(
            pl.BlockSpec((TT, B_P, A_P), lambda s: (s, 0, 0)),   # prob block
            pl.BlockSpec((B_P, H_P), lambda s: (0, 0)),          # h_T (resident)
        ),
        out_shape=(
            jax.ShapeDtypeStruct((T_P, B_P, A_P), jnp.float32),
            jax.ShapeDtypeStruct((B_P, H_P), jnp.float32),
        ),
        input_output_aliases={2: 1},                             # h0 buffer -> h_T
        compiler_params=pltpu.CompilerParams(
            dimension_semantics=("arbitrary",),                  # recurrent in time
            vmem_limit_bytes=vmem_limit),
        cost_estimate=pl.CostEstimate(flops=int(flops),
                                      transcendentals=int(transcendentals),
                                      bytes_accessed=int(bytes_accessed)),
    )(x_p, av_p, h0_p, w_slab, b_slab)

    return prob_p[:T, :B, :A], h_out_p[:B, :H]


# --------------------- parameter init / packing -----------------------------
def orthogonal(key, shape, gain=1.0):
    """Orthogonal init (same semantics as nn.init.orthogonal_) for 2-D shapes."""
    rows, cols = shape
    a = jax.random.normal(key, (max(rows, cols), min(rows, cols)), dtype=jnp.float32)
    q, r = jnp.linalg.qr(a)
    q = q * jnp.sign(jnp.diagonal(r))
    if rows < cols:
        q = q.T
    return (gain * q[:rows, :cols]).astype(jnp.float32)


def make_params(key, input_dim, hidden_dim, action_dim):
    k1, k2, k3, k4 = jax.random.split(key, 4)
    fc1_w = orthogonal(k1, (hidden_dim, input_dim), gain=1.0)            # (H, D)
    rnn_w_ih = orthogonal(k2, (3 * hidden_dim, hidden_dim), gain=1.0)    # (3H, H)
    rnn_w_hh = orthogonal(k3, (3 * hidden_dim, hidden_dim), gain=1.0)    # (3H, H)
    fc2_w = orthogonal(k4, (action_dim, hidden_dim), gain=0.01)          # (A, H)
    return {
        "w1": fc1_w.T,                                   # (D, H)  for x @ W
        "b1": jnp.zeros((hidden_dim,), jnp.float32),
        "w_ih": rnn_w_ih.T,                              # (H, 3H) cols = [r|z|n]
        "w_hh": rnn_w_hh.T,                              # (H, 3H)
        "b_ih": jnp.zeros((3 * hidden_dim,), jnp.float32),
        "b_hh": jnp.zeros((3 * hidden_dim,), jnp.float32),
        "w2": fc2_w.T,                                   # (H, A)
        "b2": jnp.zeros((action_dim,), jnp.float32),
    }


def pack_params(params, input_dim, hidden_dim, action_dim,
                matmul_dtype=jnp.bfloat16):
    """Pack weights into one padded slab IN THE MATMUL DTYPE (no in-kernel
    casts) and biases into a small f32 tile.  Slab row layout:
      [0, D_P)              fc1  weight (cols 0..H)
      [D_P, D_P+H_P)        GRU  w_ih  -> gate cols [r | z | i_n | 0 ]
      [D_P+H_P, D_P+2H_P)   GRU  w_hh  -> gate cols [r | z | 0   | h_n]
      [D_P+2H_P, D_P+3H_P)  fc2  weight (cols 0..A)
    so rows [D_P, D_P+2H_P) form the fused [a1 | h] gate weight."""
    D, H, A = input_dim, hidden_dim, action_dim
    D_P, H_P = _round_up(D, 128), _round_up(H, 128)
    G = 4 * H_P

    w = jnp.zeros((D_P + 3 * H_P, G), jnp.float32)
    w1, w_ih, w_hh, w2 = params["w1"], params["w_ih"], params["w_hh"], params["w2"]

    w = w.at[0:D, 0:H].set(w1)
    off = D_P
    w = w.at[off:off + H, 0 * H_P:0 * H_P + H].set(w_ih[:, 0:H])         # r
    w = w.at[off:off + H, 1 * H_P:1 * H_P + H].set(w_ih[:, H:2 * H])     # z
    w = w.at[off:off + H, 2 * H_P:2 * H_P + H].set(w_ih[:, 2 * H:])      # i_n
    off = D_P + H_P
    w = w.at[off:off + H, 0 * H_P:0 * H_P + H].set(w_hh[:, 0:H])         # r
    w = w.at[off:off + H, 1 * H_P:1 * H_P + H].set(w_hh[:, H:2 * H])     # z
    w = w.at[off:off + H, 3 * H_P:3 * H_P + H].set(w_hh[:, 2 * H:])      # h_n
    off = D_P + 2 * H_P
    w = w.at[off:off + H, 0:A].set(w2)

    b = jnp.zeros((8, G), jnp.float32)
    b = b.at[0, 0:H].set(params["b1"])
    b_ih, b_hh = params["b_ih"], params["b_hh"]
    b = b.at[1, 0 * H_P:0 * H_P + H].set(b_ih[0:H] + b_hh[0:H])
    b = b.at[1, 1 * H_P:1 * H_P + H].set(b_ih[H:2 * H] + b_hh[H:2 * H])
    b = b.at[1, 2 * H_P:2 * H_P + H].set(b_ih[2 * H:])
    b = b.at[1, 3 * H_P:3 * H_P + H].set(b_hh[2 * H:])
    b = b.at[2, 0:A].set(params["b2"])
    return w.astype(matmul_dtype), b


# ------------------------ pure-JAX reference ---------------------------------
def actor_reference(x_seq, avail_seq, h0, params):
    H = h0.shape[-1]
    hi = lambda a, b: jnp.dot(a, b, precision=jax.lax.Precision.HIGHEST)

    def step(h, xs):
        x, avail = xs
        a1 = jnp.maximum(hi(x, params["w1"]) + params["b1"], 0.0)
        gi = hi(a1, params["w_ih"]) + params["b_ih"]
        gh = hi(h, params["w_hh"]) + params["b_hh"]
        r = jax.nn.sigmoid(gi[:, 0:H] + gh[:, 0:H])
        z = jax.nn.sigmoid(gi[:, H:2 * H] + gh[:, H:2 * H])
        n = jnp.tanh(gi[:, 2 * H:] + r * gh[:, 2 * H:])
        h_new = (1.0 - z) * n + z * h
        logits = hi(h_new, params["w2"]) + params["b2"]
        logits = jnp.where(avail == 0.0, -1e10, logits)
        return h_new, jax.nn.softmax(logits, axis=-1)

    h_T, probs = jax.lax.scan(step, h0, (x_seq, avail_seq))
    return probs, h_T


if __name__ == "__main__":
    T, B = 8, 8
    INPUT_DIM, HIDDEN_DIM, ACTION_DIM = 32, 32, 16

    key = jax.random.PRNGKey(0)
    kw, kb, kx, ka = jax.random.split(key, 4)

    params = make_params(kw, INPUT_DIM, HIDDEN_DIM, ACTION_DIM)
    # Non-zero biases so the packed-bias path is actually exercised.
    kb1, kb2, kb3, kb4 = jax.random.split(kb, 4)
    params["b1"] = 0.1 * jax.random.normal(kb1, (HIDDEN_DIM,), jnp.float32)
    params["b_ih"] = 0.1 * jax.random.normal(kb2, (3 * HIDDEN_DIM,), jnp.float32)
    params["b_hh"] = 0.1 * jax.random.normal(kb3, (3 * HIDDEN_DIM,), jnp.float32)
    params["b2"] = 0.1 * jax.random.normal(kb4, (ACTION_DIM,), jnp.float32)

    x_seq = jax.random.normal(kx, (T, B, INPUT_DIM), dtype=jnp.float32)
    avail = (jax.random.uniform(ka, (T, B, ACTION_DIM)) > 0.3).astype(jnp.float32)
    avail = avail.at[..., 0].set(1.0)             # >=1 available action per row
    h0 = jnp.zeros((B, HIDDEN_DIM), jnp.float32)  # self.rnn_hidden starts as None

    prob_ref, h_ref = actor_reference(x_seq, avail, h0, params)

    # --- f32 MXU path, small time_block (exercises multi-block grid + T padding)
    w32, b32 = pack_params(params, INPUT_DIM, HIDDEN_DIM, ACTION_DIM, jnp.float32)
    prob32, h32 = actor_rollout(x_seq, avail, h0, w32, b32,
                                matmul_dtype=jnp.float32, time_block=3)
    jax.block_until_ready((prob32, h32))
    assert jnp.allclose(prob32, prob_ref, atol=1e-3), \
        f"f32 prob max err {float(jnp.max(jnp.abs(prob32 - prob_ref)))}"
    assert jnp.allclose(h32, h_ref, atol=1e-3), \
        f"f32 h max err {float(jnp.max(jnp.abs(h32 - h_ref)))}"

    # --- default bf16 MXU path (f32 accumulation / element-wise math)
    wbf, bbf = pack_params(params, INPUT_DIM, HIDDEN_DIM, ACTION_DIM, jnp.bfloat16)
    prob, h_T = actor_rollout(x_seq, avail, h0, wbf, bbf)
    jax.block_until_ready((prob, h_T))

    assert prob.shape == (T, B, ACTION_DIM) and h_T.shape == (B, HIDDEN_DIM)
    assert jnp.allclose(prob, prob_ref, atol=2e-2), \
        f"bf16 prob max err {float(jnp.max(jnp.abs(prob - prob_ref)))}"
    assert jnp.allclose(h_T, h_ref, atol=5e-2), \
        f"bf16 h max err {float(jnp.max(jnp.abs(h_T - h_ref)))}"
    assert jnp.allclose(jnp.sum(prob, axis=-1), 1.0, atol=1e-4)
    assert float(jnp.max(jnp.where(avail == 0.0, prob, 0.0))) < 1e-5

    print("KERNEL_OK")
</pallas_src>

<mosaic_0001>
module attributes {stable_mosaic.version = 11 : i64} {
  func.func @actor_kernel(%arg0: i32, %arg1: memref<3x8x128xf32, #tpu.memory_space<vmem>>, %arg2: memref<3x8x128xf32, #tpu.memory_space<vmem>>, %arg3: memref<8x128xf32, #tpu.memory_space<vmem>>, %arg4: memref<512x512xf32, #tpu.memory_space<vmem>>, %arg5: memref<8x512xf32, #tpu.memory_space<vmem>>, %arg6: memref<3x8x128xf32, #tpu.memory_space<vmem>>, %arg7: memref<8x128xf32, #tpu.memory_space<vmem>>) attributes {dimension_semantics = [#tpu.dimension_semantics<arbitrary>], iteration_bounds = array<i64: 3>, scalar_prefetch = 0 : i64, scratch_operands = 0 : i64, tpu.core_type = #tpu.core_type<tc>, window_params = [{transform_indices = @transform_0, window_bounds = array<i64: 3, 8, 128>}, {transform_indices = @transform_1, window_bounds = array<i64: 3, 8, 128>}, {pipeline_mode = #tpu.pipeline_mode<synchronous>, transform_indices = @transform_2, window_bounds = array<i64: 8, 128>}, {pipeline_mode = #tpu.pipeline_mode<synchronous>, transform_indices = @transform_3, window_bounds = array<i64: 512, 512>}, {pipeline_mode = #tpu.pipeline_mode<synchronous>, transform_indices = @transform_4, window_bounds = array<i64: 8, 512>}, {transform_indices = @transform_5, window_bounds = array<i64: 3, 8, 128>}, {pipeline_mode = #tpu.pipeline_mode<synchronous>, transform_indices = @transform_6, window_bounds = array<i64: 8, 128>}]} {
    %c0_i32 = arith.constant 0 : i32
    %0 = arith.cmpi eq, %arg0, %c0_i32 : i32
    %1 = arith.extui %0 : i1 to i32
    %c0_i32_0 = arith.constant 0 : i32
    %2 = arith.cmpi ne, %1, %c0_i32_0 : i32
    scf.if %2 {
      %c0_76 = arith.constant 0 : index
      %c0_77 = arith.constant 0 : index
      %201 = vector.load %arg3[%c0_76, %c0_77] : memref<8x128xf32, #tpu.memory_space<vmem>>, vector<8x128xf32>
      %c0_78 = arith.constant 0 : index
      %c0_79 = arith.constant 0 : index
      %202 = vector.load %arg7[%c0_78, %c0_79] : memref<8x128xf32, #tpu.memory_space<vmem>>, vector<8x128xf32>
      tpu.vector_store %arg7[%c0_78, %c0_79], %201 {strides = array<i32>} : memref<8x128xf32, #tpu.memory_space<vmem>>, vector<8x128xf32>,
    } else {
    }
    %c0 = arith.constant 0 : index
    %c0_1 = arith.constant 0 : index
    %3 = vector.load %arg4[%c0, %c0_1] : memref<512x512xf32, #tpu.memory_space<vmem>>, vector<128x128xf32>
    %c128 = arith.constant 128 : index
    %c0_2 = arith.constant 0 : index
    %4 = vector.load %arg4[%c128, %c0_2] : memref<512x512xf32, #tpu.memory_space<vmem>>, vector<256x512xf32>
    %c384 = arith.constant 384 : index
    %c0_3 = arith.constant 0 : index
    %5 = vector.load %arg4[%c384, %c0_3] : memref<512x512xf32, #tpu.memory_space<vmem>>, vector<128x128xf32>
    %c0_4 = arith.constant 0 : index
    %c0_5 = arith.constant 0 : index
    %6 = vector.load %arg5[%c0_4, %c0_5] : memref<8x512xf32, #tpu.memory_space<vmem>>, vector<1x128xf32>
    %c1 = arith.constant 1 : index
    %c0_6 = arith.constant 0 : index
    %7 = vector.load %arg5[%c1, %c0_6] : memref<8x512xf32, #tpu.memory_space<vmem>>, vector<1x512xf32>
    %c2 = arith.constant 2 : index
    %c0_7 = arith.constant 0 : index
    %8 = vector.load %arg5[%c2, %c0_7] : memref<8x512xf32, #tpu.memory_space<vmem>>, vector<1x128xf32>
    %c0_i32_8 = arith.constant 0 : i32
    %c3_i32 = arith.constant 3 : i32
    %9 = arith.muli %arg0, %c3_i32 : i32
    %10 = arith.addi %9, %c0_i32_8 : i32
    %c0_9 = arith.constant 0 : index
    %c0_10 = arith.constant 0 : index
    %11 = vector.load %arg7[%c0_9, %c0_10] : memref<8x128xf32, #tpu.memory_space<vmem>>, vector<8x128xf32>
    %12 = arith.index_cast %c0_i32_8 : i32 to index
    %c0_11 = arith.constant 0 : index
    %c0_12 = arith.constant 0 : index
    %13 = vector.load %arg1[%12, %c0_11, %c0_12] : memref<3x8x128xf32, #tpu.memory_space<vmem>>, vector<1x8x128xf32>
    %14 = vector.shape_cast %13 : vector<1x8x128xf32> to vector<8x128xf32>
    %cst = arith.constant dense<0.000000e+00> : vector<8x128xf32>
    %15 = tpu.matmul %14, %3, %cst {dimension_numbers = #tpu.dot_dimension_numbers<[1], [0], [0], [1], [0, 0, 1, 1], [], []>} : vector<8x128xf32>, vector<128x128xf32>, vector<8x128xf32> -> vector<8x128xf32>
    %16 = vector.broadcast %6 : vector<1x128xf32> to vector<8x128xf32>
    %17 = arith.addf %15, %16 : vector<8x128xf32>
    %cst_13 = arith.constant 0.000000e+00 : f32
    %18 = vector.broadcast %cst_13 : f32 to vector<8x128xf32>
    %19 = arith.maximumf %17, %18 : vector<8x128xf32>
    %20 = tpu.concatenate %19, %11 in 1 : vector<8x128xf32>, vector<8x128xf32> -> vector<8x256xf32>
    %cst_14 = arith.constant dense<0.000000e+00> : vector<8x512xf32>
    %21 = tpu.matmul %20, %4, %cst_14 {dimension_numbers = #tpu.dot_dimension_numbers<[1], [0], [0], [1], [0, 0, 1, 1], [], []>} : vector<8x256xf32>, vector<256x512xf32>, vector<8x512xf32> -> vector<8x512xf32>
    %22 = vector.broadcast %7 : vector<1x512xf32> to vector<8x512xf32>
    %23 = arith.addf %21, %22 : vector<8x512xf32>
    %24 = vector.extract_strided_slice %23 {offsets = [0, 0], sizes = [8, 128], strides = [1, 1]} : vector<8x512xf32> to vector<8x128xf32>
    %25 = arith.negf %24 : vector<8x128xf32>
    %26 = math.exp %25 : vector<8x128xf32>
    %cst_15 = arith.constant 1.000000e+00 : f32
    %27 = vector.broadcast %cst_15 : f32 to vector<8x128xf32>
    %28 = arith.addf %27, %26 : vector<8x128xf32>
    %29 = arith.divf %27, %28 : vector<8x128xf32>
    %30 = vector.extract_strided_slice %23 {offsets = [0, 128], sizes = [8, 128], strides = [1, 1]} : vector<8x512xf32> to vector<8x128xf32>
    %31 = arith.negf %30 : vector<8x128xf32>
    %32 = math.exp %31 : vector<8x128xf32>
    %cst_16 = arith.constant 1.000000e+00 : f32
    %33 = vector.broadcast %cst_16 : f32 to vector<8x128xf32>
    %34 = arith.addf %33, %32 : vector<8x128xf32>
    %35 = arith.divf %33, %34 : vector<8x128xf32>
    %36 = vector.extract_strided_slice %23 {offsets = [0, 256], sizes = [8, 128], strides = [1, 1]} : vector<8x512xf32> to vector<8x128xf32>
    %37 = vector.extract_strided_slice %23 {offsets = [0, 384], sizes = [8, 128], strides = [1, 1]} : vector<8x512xf32> to vector<8x128xf32>
    %38 = arith.mulf %29, %37 : vector<8x128xf32>
    %39 = arith.addf %36, %38 : vector<8x128xf32>
    %40 = math.tanh %39 : vector<8x128xf32>
    %cst_17 = arith.constant 1.000000e+00 : f32
    %41 = vector.broadcast %cst_17 : f32 to vector<8x128xf32>
    %42 = arith.subf %41, %35 : vector<8x128xf32>
    %43 = arith.mulf %42, %40 : vector<8x128xf32>
    %44 = arith.mulf %35, %11 : vector<8x128xf32>
    %45 = arith.addf %43, %44 : vector<8x128xf32>
    %cst_18 = arith.constant dense<0.000000e+00> : vector<8x128xf32>
    %46 = tpu.matmul %45, %5, %cst_18 {dimension_numbers = #tpu.dot_dimension_numbers<[1], [0], [0], [1], [0, 0, 1, 1], [], []>} : vector<8x128xf32>, vector<128x128xf32>, vector<8x128xf32> -> vector<8x128xf32>
    %47 = vector.broadcast %8 : vector<1x128xf32> to vector<8x128xf32>
    %48 = arith.addf %46, %47 : vector<8x128xf32>
    %49 = arith.index_cast %c0_i32_8 : i32 to index
    %c0_19 = arith.constant 0 : index
    %c0_20 = arith.constant 0 : index
    %50 = vector.load %arg2[%49, %c0_19, %c0_20] : memref<3x8x128xf32, #tpu.memory_space<vmem>>, vector<1x8x128xf32>
    %51 = vector.shape_cast %50 : vector<1x8x128xf32> to vector<8x128xf32>
    %cst_21 = arith.constant 0.000000e+00 : f32
    %52 = vector.broadcast %cst_21 : f32 to vector<8x128xf32>
    %53 = arith.cmpf oeq, %51, %52 : vector<8x128xf32>
    %cst_22 = arith.constant -1.000000e+10 : f32
    %54 = vector.broadcast %cst_22 : f32 to vector<8x128xf32>
    %55 = arith.select %53, %54, %48 : vector<8x128xi1>, vector<8x128xf32>
    %cst_23 = arith.constant dense<0xFF800000> : vector<8xf32>
    %56 = vector.multi_reduction <maximumf>, %55, %cst_23 [1] : vector<8x128xf32> to vector<8xf32>
    %57 = vector.shape_cast %56 : vector<8xf32> to vector<8x1xf32>
    %58 = vector.broadcast %57 : vector<8x1xf32> to vector<8x128xf32>
    %59 = arith.subf %55, %58 : vector<8x128xf32>
    %60 = math.exp %59 : vector<8x128xf32>
    %cst_24 = arith.constant dense<0.000000e+00> : vector<8xf32>
    %61 = vector.multi_reduction <add>, %60, %cst_24 [1] : vector<8x128xf32> to vector<8xf32>
    %62 = vector.shape_cast %61 : vector<8xf32> to vector<8x1xf32>
    %63 = tpu.reciprocal %62 : vector<8x1xf32> -> vector<8x1xf32>
    %64 = vector.broadcast %63 : vector<8x1xf32> to vector<8x128xf32>
    %65 = arith.mulf %60, %64 : vector<8x128xf32>
    %66 = arith.index_cast %c0_i32_8 : i32 to index
    %c0_25 = arith.constant 0 : index
    %c0_26 = arith.constant 0 : index
    %67 = vector.load %arg6[%66, %c0_25, %c0_26] : memref<3x8x128xf32, #tpu.memory_space<vmem>>, vector<1x8x128xf32>
    %68 = vector.shape_cast %67 : vector<1x8x128xf32> to vector<8x128xf32>
    %69 = vector.shape_cast %65 : vector<8x128xf32> to vector<1x8x128xf32>
    tpu.vector_store %arg6[%66, %c0_25, %c0_26], %69 {strides = array<i32>} : memref<3x8x128xf32, #tpu.memory_space<vmem>>, vector<1x8x128xf32>,
    %c8_i32 = arith.constant 8 : i32
    %70 = arith.cmpi slt, %10, %c8_i32 : i32
    %71 = arith.select %70, %45, %11 : vector<8x128xf32>
    %c0_27 = arith.constant 0 : index
    %c0_28 = arith.constant 0 : index
    %72 = vector.load %arg7[%c0_27, %c0_28] : memref<8x128xf32, #tpu.memory_space<vmem>>, vector<8x128xf32>
    tpu.vector_store %arg7[%c0_27, %c0_28], %71 {strides = array<i32>} : memref<8x128xf32, #tpu.memory_space<vmem>>, vector<8x128xf32>,
    %c1_i32 = arith.constant 1 : i32
    %c3_i32_29 = arith.constant 3 : i32
    %73 = arith.muli %arg0, %c3_i32_29 : i32
    %74 = arith.addi %73, %c1_i32 : i32
    %c0_30 = arith.constant 0 : index
    %c0_31 = arith.constant 0 : index
    %75 = vector.load %arg7[%c0_30, %c0_31] : memref<8x128xf32, #tpu.memory_space<vmem>>, vector<8x128xf32>
    %76 = arith.index_cast %c1_i32 : i32 to index
    %c0_32 = arith.constant 0 : index
    %c0_33 = arith.constant 0 : index
    %77 = vector.load %arg1[%76, %c0_32, %c0_33] : memref<3x8x128xf32, #tpu.memory_space<vmem>>, vector<1x8x128xf32>
    %78 = vector.shape_cast %77 : vector<1x8x128xf32> to vector<8x128xf32>
    %cst_34 = arith.constant dense<0.000000e+00> : vector<8x128xf32>
    %79 = tpu.matmul %78, %3, %cst_34 {dimension_numbers = #tpu.dot_dimension_numbers<[1], [0], [0], [1], [0, 0, 1, 1], [], []>} : vector<8x128xf32>, vector<128x128xf32>, vector<8x128xf32> -> vector<8x128xf32>
    %80 = vector.broadcast %6 : vector<1x128xf32> to vector<8x128xf32>
    %81 = arith.addf %79, %80 : vector<8x128xf32>
    %cst_35 = arith.constant 0.000000e+00 : f32
    %82 = vector.broadcast %cst_35 : f32 to vector<8x128xf32>
    %83 = arith.maximumf %81, %82 : vector<8x128xf32>
    %84 = tpu.concatenate %83, %75 in 1 : vector<8x128xf32>, vector<8x128xf32> -> vector<8x256xf32>
    %cst_36 = arith.constant dense<0.000000e+00> : vector<8x512xf32>
    %85 = tpu.matmul %84, %4, %cst_36 {dimension_numbers = #tpu.dot_dimension_numbers<[1], [0], [0], [1], [0, 0, 1, 1], [], []>} : vector<8x256xf32>, vector<256x512xf32>, vector<8x512xf32> -> vector<8x512xf32>
    %86 = vector.broadcast %7 : vector<1x512xf32> to vector<8x512xf32>
    %87 = arith.addf %85, %86 : vector<8x512xf32>
    %88 = vector.extract_strided_slice %87 {offsets = [0, 0], sizes = [8, 128], strides = [1, 1]} : vector<8x512xf32> to vector<8x128xf32>
    %89 = arith.negf %88 : vector<8x128xf32>
    %90 = math.exp %89 : vector<8x128xf32>
    %cst_37 = arith.constant 1.000000e+00 : f32
    %91 = vector.broadcast %cst_37 : f32 to vector<8x128xf32>
    %92 = arith.addf %91, %90 : vector<8x128xf32>
    %93 = arith.divf %91, %92 : vector<8x128xf32>
    %94 = vector.extract_strided_slice %87 {offsets = [0, 128], sizes = [8, 128], strides = [1, 1]} : vector<8x512xf32> to vector<8x128xf32>
    %95 = arith.negf %94 : vector<8x128xf32>
    %96 = math.exp %95 : vector<8x128xf32>
    %cst_38 = arith.constant 1.000000e+00 : f32
    %97 = vector.broadcast %cst_38 : f32 to vector<8x128xf32>
    %98 = arith.addf %97, %96 : vector<8x128xf32>
    %99 = arith.divf %97, %98 : vector<8x128xf32>
    %100 = vector.extract_strided_slice %87 {offsets = [0, 256], sizes = [8, 128], strides = [1, 1]} : vector<8x512xf32> to vector<8x128xf32>
    %101 = vector.extract_strided_slice %87 {offsets = [0, 384], sizes = [8, 128], strides = [1, 1]} : vector<8x512xf32> to vector<8x128xf32>
    %102 = arith.mulf %93, %101 : vector<8x128xf32>
    %103 = arith.addf %100, %102 : vector<8x128xf32>
    %104 = math.tanh %103 : vector<8x128xf32>
    %cst_39 = arith.constant 1.000000e+00 : f32
    %105 = vector.broadcast %cst_39 : f32 to vector<8x128xf32>
    %106 = arith.subf %105, %99 : vector<8x128xf32>
    %107 = arith.mulf %106, %104 : vector<8x128xf32>
    %108 = arith.mulf %99, %75 : vector<8x128xf32>
    %109 = arith.addf %107, %108 : vector<8x128xf32>
    %cst_40 = arith.constant dense<0.000000e+00> : vector<8x128xf32>
    %110 = tpu.matmul %109, %5, %cst_40 {dimension_numbers = #tpu.dot_dimension_numbers<[1], [0], [0], [1], [0, 0, 1, 1], [], []>} : vector<8x128xf32>, vector<128x128xf32>, vector<8x128xf32> -> vector<8x128xf32>
    %111 = vector.broadcast %8 : vector<1x128xf32> to vector<8x128xf32>
    %112 = arith.addf %110, %111 : vector<8x128xf32>
    %113 = arith.index_cast %c1_i32 : i32 to index
    %c0_41 = arith.constant 0 : index
    %c0_42 = arith.constant 0 : index
    %114 = vector.load %arg2[%113, %c0_41, %c0_42] : memref<3x8x128xf32, #tpu.memory_space<vmem>>, vector<1x8x128xf32>
    %115 = vector.shape_cast %114 : vector<1x8x128xf32> to vector<8x128xf32>
    %cst_43 = arith.constant 0.000000e+00 : f32
    %116 = vector.broadcast %cst_43 : f32 to vector<8x128xf32>
    %117 = arith.cmpf oeq, %115, %116 : vector<8x128xf32>
    %cst_44 = arith.constant -1.000000e+10 : f32
    %118 = vector.broadcast %cst_44 : f32 to vector<8x128xf32>
    %119 = arith.select %117, %118, %112 : vector<8x128xi1>, vector<8x128xf32>
    %cst_45 = arith.constant dense<0xFF800000> : vector<8xf32>
    %120 = vector.multi_reduction <maximumf>, %119, %cst_45 [1] : vector<8x128xf32> to vector<8xf32>
    %121 = vector.shape_cast %120 : vector<8xf32> to vector<8x1xf32>
    %122 = vector.broadcast %121 : vector<8x1xf32> to vector<8x128xf32>
    %123 = arith.subf %119, %122 : vector<8x128xf32>
    %124 = math.exp %123 : vector<8x128xf32>
    %cst_46 = arith.constant dense<0.000000e+00> : vector<8xf32>
    %125 = vector.multi_reduction <add>, %124, %cst_46 [1] : vector<8x128xf32> to vector<8xf32>
    %126 = vector.shape_cast %125 : vector<8xf32> to vector<8x1xf32>
    %127 = tpu.reciprocal %126 : vector<8x1xf32> -> vector<8x1xf32>
    %128 = vector.broadcast %127 : vector<8x1xf32> to vector<8x128xf32>
    %129 = arith.mulf %124, %128 : vector<8x128xf32>
    %130 = arith.index_cast %c1_i32 : i32 to index
    %c0_47 = arith.constant 0 : index
    %c0_48 = arith.constant 0 : index
    %131 = vector.load %arg6[%130, %c0_47, %c0_48] : memref<3x8x128xf32, #tpu.memory_space<vmem>>, vector<1x8x128xf32>
    %132 = vector.shape_cast %131 : vector<1x8x128xf32> to vector<8x128xf32>
    %133 = vector.shape_cast %129 : vector<8x128xf32> to vector<1x8x128xf32>
    tpu.vector_store %arg6[%130, %c0_47, %c0_48], %133 {strides = array<i32>} : memref<3x8x128xf32, #tpu.memory_space<vmem>>, vector<1x8x128xf32>,
    %c8_i32_49 = arith.constant 8 : i32
    %134 = arith.cmpi slt, %74, %c8_i32_49 : i32
    %135 = arith.select %134, %109, %75 : vector<8x128xf32>
    %c0_50 = arith.constant 0 : index
    %c0_51 = arith.constant 0 : index
    %136 = vector.load %arg7[%c0_50, %c0_51] : memref<8x128xf32, #tpu.memory_space<vmem>>, vector<8x128xf32>
    tpu.vector_store %arg7[%c0_50, %c0_51], %135 {strides = array<i32>} : memref<8x128xf32, #tpu.memory_space<vmem>>, vector<8x128xf32>,
    %c2_i32 = arith.constant 2 : i32
    %c3_i32_52 = arith.constant 3 : i32
    %137 = arith.muli %arg0, %c3_i32_52 : i32
    %138 = arith.addi %137, %c2_i32 : i32
    %c0_53 = arith.constant 0 : index
    %c0_54 = arith.constant 0 : index
    %139 = vector.load %arg7[%c0_53, %c0_54] : memref<8x128xf32, #tpu.memory_space<vmem>>, vector<8x128xf32>
    %140 = arith.index_cast %c2_i32 : i32 to index
    %c0_55 = arith.constant 0 : index
    %c0_56 = arith.constant 0 : index
    %141 = vector.load %arg1[%140, %c0_55, %c0_56] : memref<3x8x128xf32, #tpu.memory_space<vmem>>, vector<1x8x128xf32>
    %142 = vector.shape_cast %141 : vector<1x8x128xf32> to vector<8x128xf32>
    %cst_57 = arith.constant dense<0.000000e+00> : vector<8x128xf32>
    %143 = tpu.matmul %142, %3, %cst_57 {dimension_numbers = #tpu.dot_dimension_numbers<[1], [0], [0], [1], [0, 0, 1, 1], [], []>} : vector<8x128xf32>, vector<128x128xf32>, vector<8x128xf32> -> vector<8x128xf32>
    %144 = vector.broadcast %6 : vector<1x128xf32> to vector<8x128xf32>
    %145 = arith.addf %143, %144 : vector<8x128xf32>
    %cst_58 = arith.constant 0.000000e+00 : f32
    %146 = vector.broadcast %cst_58 : f32 to vector<8x128xf32>
    %147 = arith.maximumf %145, %146 : vector<8x128xf32>
    %148 = tpu.concatenate %147, %139 in 1 : vector<8x128xf32>, vector<8x128xf32> -> vector<8x256xf32>
    %cst_59 = arith.constant dense<0.000000e+00> : vector<8x512xf32>
    %149 = tpu.matmul %148, %4, %cst_59 {dimension_numbers = #tpu.dot_dimension_numbers<[1], [0], [0], [1], [0, 0, 1, 1], [], []>} : vector<8x256xf32>, vector<256x512xf32>, vector<8x512xf32> -> vector<8x512xf32>
    %150 = vector.broadcast %7 : vector<1x512xf32> to vector<8x512xf32>
    %151 = arith.addf %149, %150 : vector<8x512xf32>
    %152 = vector.extract_strided_slice %151 {offsets = [0, 0], sizes = [8, 128], strides = [1, 1]} : vector<8x512xf32> to vector<8x128xf32>
    %153 = arith.negf %152 : vector<8x128xf32>
    %154 = math.exp %153 : vector<8x128xf32>
    %cst_60 = arith.constant 1.000000e+00 : f32
    %155 = vector.broadcast %cst_60 : f32 to vector<8x128xf32>
    %156 = arith.addf %155, %154 : vector<8x128xf32>
    %157 = arith.divf %155, %156 : vector<8x128xf32>
    %158 = vector.extract_strided_slice %151 {offsets = [0, 128], sizes = [8, 128], strides = [1, 1]} : vector<8x512xf32> to vector<8x128xf32>
    %159 = arith.negf %158 : vector<8x128xf32>
    %160 = math.exp %159 : vector<8x128xf32>
    %cst_61 = arith.constant 1.000000e+00 : f32
    %161 = vector.broadcast %cst_61 : f32 to vector<8x128xf32>
    %162 = arith.addf %161, %160 : vector<8x128xf32>
    %163 = arith.divf %161, %162 : vector<8x128xf32>
    %164 = vector.extract_strided_slice %151 {offsets = [0, 256], sizes = [8, 128], strides = [1, 1]} : vector<8x512xf32> to vector<8x128xf32>
    %165 = vector.extract_strided_slice %151 {offsets = [0, 384], sizes = [8, 128], strides = [1, 1]} : vector<8x512xf32> to vector<8x128xf32>
    %166 = arith.mulf %157, %165 : vector<8x128xf32>
    %167 = arith.addf %164, %166 : vector<8x128xf32>
    %168 = math.tanh %167 : vector<8x128xf32>
    %cst_62 = arith.constant 1.000000e+00 : f32
    %169 = vector.broadcast %cst_62 : f32 to vector<8x128xf32>
    %170 = arith.subf %169, %163 : vector<8x128xf32>
    %171 = arith.mulf %170, %168 : vector<8x128xf32>
    %172 = arith.mulf %163, %139 : vector<8x128xf32>
    %173 = arith.addf %171, %172 : vector<8x128xf32>
    %cst_63 = arith.constant dense<0.000000e+00> : vector<8x128xf32>
    %174 = tpu.matmul %173, %5, %cst_63 {dimension_numbers = #tpu.dot_dimension_numbers<[1], [0], [0], [1], [0, 0, 1, 1], [], []>} : vector<8x128xf32>, vector<128x128xf32>, vector<8x128xf32> -> vector<8x128xf32>
    %175 = vector.broadcast %8 : vector<1x128xf32> to vector<8x128xf32>
    %176 = arith.addf %174, %175 : vector<8x128xf32>
    %177 = arith.index_cast %c2_i32 : i32 to index
    %c0_64 = arith.constant 0 : index
    %c0_65 = arith.constant 0 : index
    %178 = vector.load %arg2[%177, %c0_64, %c0_65] : memref<3x8x128xf32, #tpu.memory_space<vmem>>, vector<1x8x128xf32>
    %179 = vector.shape_cast %178 : vector<1x8x128xf32> to vector<8x128xf32>
    %cst_66 = arith.constant 0.000000e+00 : f32
    %180 = vector.broadcast %cst_66 : f32 to vector<8x128xf32>
    %181 = arith.cmpf oeq, %179, %180 : vector<8x128xf32>
    %cst_67 = arith.constant -1.000000e+10 : f32
    %182 = vector.broadcast %cst_67 : f32 to vector<8x128xf32>
    %183 = arith.select %181, %182, %176 : vector<8x128xi1>, vector<8x128xf32>
    %cst_68 = arith.constant dense<0xFF800000> : vector<8xf32>
    %184 = vector.multi_reduction <maximumf>, %183, %cst_68 [1] : vector<8x128xf32> to vector<8xf32>
    %185 = vector.shape_cast %184 : vector<8xf32> to vector<8x1xf32>
    %186 = vector.broadcast %185 : vector<8x1xf32> to vector<8x128xf32>
    %187 = arith.subf %183, %186 : vector<8x128xf32>
    %188 = math.exp %187 : vector<8x128xf32>
    %cst_69 = arith.constant dense<0.000000e+00> : vector<8xf32>
    %189 = vector.multi_reduction <add>, %188, %cst_69 [1] : vector<8x128xf32> to vector<8xf32>
    %190 = vector.shape_cast %189 : vector<8xf32> to vector<8x1xf32>
    %191 = tpu.reciprocal %190 : vector<8x1xf32> -> vector<8x1xf32>
    %192 = vector.broadcast %191 : vector<8x1xf32> to vector<8x128xf32>
    %193 = arith.mulf %188, %192 : vector<8x128xf32>
    %194 = arith.index_cast %c2_i32 : i32 to index
    %c0_70 = arith.constant 0 : index
    %c0_71 = arith.constant 0 : index
    %195 = vector.load %arg6[%194, %c0_70, %c0_71] : memref<3x8x128xf32, #tpu.memory_space<vmem>>, vector<1x8x128xf32>
    %196 = vector.shape_cast %195 : vector<1x8x128xf32> to vector<8x128xf32>
    %197 = vector.shape_cast %193 : vector<8x128xf32> to vector<1x8x128xf32>
    tpu.vector_store %arg6[%194, %c0_70, %c0_71], %197 {strides = array<i32>} : memref<3x8x128xf32, #tpu.memory_space<vmem>>, vector<1x8x128xf32>,
    %c8_i32_72 = arith.constant 8 : i32
    %198 = arith.cmpi slt, %138, %c8_i32_72 : i32
    %199 = arith.select %198, %173, %139 : vector<8x128xf32>
    %c0_73 = arith.constant 0 : index
    %c0_74 = arith.constant 0 : index
    %200 = vector.load %arg7[%c0_73, %c0_74] : memref<8x128xf32, #tpu.memory_space<vmem>>, vector<8x128xf32>
    tpu.vector_store %arg7[%c0_73, %c0_74], %199 {strides = array<i32>} : memref<8x128xf32, #tpu.memory_space<vmem>>, vector<8x128xf32>,
    %c3_i32_75 = arith.constant 3 : i32
    return
  }
  func.func @transform_0(%arg0: i32) -> (i32, i32, i32) {
    %c0_i32 = arith.constant 0 : i32
    %c0_i32_0 = arith.constant 0 : i32
    %c0_i32_1 = arith.constant 0 : i32
    return %arg0, %c0_i32, %c0_i32_0 : i32, i32, i32
  }
  func.func @transform_1(%arg0: i32) -> (i32, i32, i32) {
    %c0_i32 = arith.constant 0 : i32
    %c0_i32_0 = arith.constant 0 : i32
    %c0_i32_1 = arith.constant 0 : i32
    return %arg0, %c0_i32, %c0_i32_0 : i32, i32, i32
  }
  func.func @transform_2(%arg0: i32) -> (i32, i32) {
    %c0_i32 = arith.constant 0 : i32
    %c0_i32_0 = arith.constant 0 : i32
    %c0_i32_1 = arith.constant 0 : i32
    return %c0_i32, %c0_i32_0 : i32, i32
  }
  func.func @transform_3(%arg0: i32) -> (i32, i32) {
    %c0_i32 = arith.constant 0 : i32
    %c0_i32_0 = arith.constant 0 : i32
    %c0_i32_1 = arith.constant 0 : i32
    return %c0_i32, %c0_i32_0 : i32, i32
  }
  func.func @transform_4(%arg0: i32) -> (i32, i32) {
    %c0_i32 = arith.constant 0 : i32
    %c0_i32_0 = arith.constant 0 : i32
    %c0_i32_1 = arith.constant 0 : i32
    return %c0_i32, %c0_i32_0 : i32, i32
  }
  func.func @transform_5(%arg0: i32) -> (i32, i32, i32) {
    %c0_i32 = arith.constant 0 : i32
    %c0_i32_0 = arith.constant 0 : i32
    %c0_i32_1 = arith.constant 0 : i32
    return %arg0, %c0_i32, %c0_i32_0 : i32, i32, i32
  }
  func.func @transform_6(%arg0: i32) -> (i32, i32) {
    %c0_i32 = arith.constant 0 : i32
    %c0_i32_0 = arith.constant 0 : i32
    %c0_i32_1 = arith.constant 0 : i32
    return %c0_i32, %c0_i32_0 : i32, i32
  }
}

</mosaic_0001>

<llo_original>
// kernel: actor_rollout.1
$region0: #{actor_rollout.1}
  #allocation0 [shape = 'u32[]', space=smem, size = 0x4, offset = 0x4, fixed_abs, tag = 'smem constant byte address 0x4 - core index']
  #allocation1 [shape = 'u32[144,128]{1,0:T(1,128)}', space=vmem, size = 0x12000, scoped, tag = 'internal scratch']
  %s0 = inlined_call_operand.vmem [shape: f32[9,8,128], index: 0, kind: input, shape index: {}]
  %s1 = inlined_call_operand.vmem [shape: f32[9,8,128], index: 1, kind: input, shape index: {}]
  %s2 = inlined_call_operand.vmem [shape: f32[8,128], index: 2, kind: input, shape index: {}, may-alias: {2,6}]
  %s3 = inlined_call_operand.hbm [shape: f32[512,512], index: 3, kind: input, shape index: {}]
  %s4 = inlined_call_operand.vmem [shape: f32[8,512], index: 4, kind: input, shape index: {}]
  %s5 = inlined_call_operand.vmem [shape: f32[9,8,128], index: 5, kind: output, shape index: {0}]
  %s6 = inlined_call_operand.vmem [shape: f32[8,128], index: 6, kind: output, shape index: {1}, may-alias: {2,6}]
  %7 = xla_tuple %s5, %s6
  %s8 = sld [smem:[#allocation0]]
  $region69: #{actor_rollout.1} parent=0
    _
  %s10 = ssub.s32 1, %s8
  %s11 = scalar_select 0, %s10, %s8
  $region1: #{actor_rollout.1} parent=0
    #allocation2 [shape = 'u8[1048576]{0}', space=vmem, size = 0x100000, scoped, tag = 'input window, operand 3, single buffered']
    #allocation3 [shape = 's32[2]{0}', space=sflag, size = 0x8, scoped, tag = 'scoped memory for actor_rollout.1']
    %12 = vsyncpa [#allocation3], 0
    loop: start=0, step=1, limit=5
    $region2: #{actor_rollout.1} parent=1 // loop_pre_header
      _
    $region3: #{actor_rollout.1} parent=1 // loop_header
      %s14 = sphi 0, %s18
      %p15 = scmp.ge.s32.totalorder %s14, 5
      %s24 = sphi 0, %s26
      %s27 = sphi 0, %s24
      %s28 = sphi 0, %s27
      %s44 = sphi 0, %s28
      %s50 = sphi 0, %s52
      %s53 = sphi 0, %s50
      %s54 = sphi 0, %s53
      %s70 = sphi 0, %s54
      %s74 = sphi 0, %s74
      %s76 = sphi 0, %s74
      %s77 = sphi 0, %s76
      %s91 = sphi 0, %s77
      %s95 = sphi 0, %s95
      %s97 = sphi 0, %s95
      %s98 = sphi 0, %s97
      %s112 = sphi 0, %s98
      %s116 = sphi 0, %s116
      %s118 = sphi 0, %s116
      %s119 = sphi 0, %s118
      %s133 = sphi 0, %s119
      %s139 = sphi 0, %s141
      %s142 = sphi 0, %s139
      %s143 = sphi 0, %s142
      %s159 = sphi 0, %s143
      %s163 = sphi 0, %s163
      %s165 = sphi 0, %s163
      %s166 = sphi 0, %s165
      %s180 = sphi 0, %s166
    $region4: #{actor_rollout.1} parent=1 // loop_header_branch
      %17 = sbr.rel (%p15) target = $region8
    $region5: #{actor_rollout.1} parent=1 // loop_body
      %s19 = ssub.s32 %s14, 1
      %s20 = ssub.s32 %s14, 2
      %s21 = sadd.s32 %s14, 1
      %s22 = ssub.s32 %s14, %s21
      %p23 = scmp.eq.s32.totalorder %s22, 0
      %s25 = sadd.s32 %s24, 1
      %s26 = scalar_select %p23, %s24, %s25
      %p29 = pneg %p23
      %p30 = scmp.eq.s32.totalorder %s14, 2
      %p31 = por %p29, %p30
      %p32 = scmp.ne.s32.totalorder %s24, %s27
      %p33 = scmp.eq.s32.totalorder %s14, 0
      %p34 = por %p32, %p33
      %p35 = scmp.ne.s32.totalorder %s24, %s27
      %p36 = scmp.eq.s32.totalorder %s19, 2
      %p37 = por %p35, %p36
      %p38 = scmp.ne.s32.totalorder %s27, %s28
      %p39 = scmp.eq.s32.totalorder %s19, 0
      %p40 = por %p38, %p39
      %p41 = scmp.ne.s32.totalorder %s27, %s28
      %p42 = scmp.eq.s32.totalorder %s20, 2
      %p43 = por %p41, %p42
      %p45 = scmp.ne.s32.totalorder %s28, %s44
      %p46 = scmp.eq.s32.totalorder %s20, 0
      %p47 = por %p45, %p46
      %s48 = ssub.s32 %s14, %s21
      %p49 = scmp.eq.s32.totalorder %s48, 0
      %s51 = sadd.s32 %s50, 1
      %s52 = scalar_select %p49, %s50, %s51
      %p55 = pneg %p49
      %p56 = scmp.eq.s32.totalorder %s14, 2
      %p57 = por %p55, %p56
      %p58 = scmp.ne.s32.totalorder %s50, %s53
      %p59 = scmp.eq.s32.totalorder %s14, 0
      %p60 = por %p58, %p59
      %p61 = scmp.ne.s32.totalorder %s50, %s53
      %p62 = scmp.eq.s32.totalorder %s19, 2
      %p63 = por %p61, %p62
      %p64 = scmp.ne.s32.totalorder %s53, %s54
      %p65 = scmp.eq.s32.totalorder %s19, 0
      %p66 = por %p64, %p65
      %p67 = scmp.ne.s32.totalorder %s53, %s54
      %p68 = scmp.eq.s32.totalorder %s20, 2
      %p69 = por %p67, %p68
      %p71 = scmp.ne.s32.totalorder %s54, %s70
      %p72 = scmp.eq.s32.totalorder %s20, 0
      %p73 = por %p71, %p72
      %s75 = sadd.s32 %s74, 1
      %p78 = scmp.eq.s32.totalorder %s14, 2
      %p79 = scmp.ne.s32.totalorder %s74, %s76
      %p80 = scmp.eq.s32.totalorder %s14, 0
      %p81 = por %p79, %p80
      %p82 = scmp.ne.s32.totalorder %s74, %s76
      %p83 = scmp.eq.s32.totalorder %s19, 2
      %p84 = por %p82, %p83
      %p85 = scmp.ne.s32.totalorder %s76, %s77
      %p86 = scmp.eq.s32.totalorder %s19, 0
      %p87 = por %p85, %p86
      %p88 = scmp.ne.s32.totalorder %s76, %s77
      %p89 = scmp.eq.s32.totalorder %s20, 2
      %p90 = por %p88, %p89
      %p92 = scmp.ne.s32.totalorder %s77, %s91
      %p93 = scmp.eq.s32.totalorder %s20, 0
      %p94 = por %p92, %p93
      %s96 = sadd.s32 %s95, 1
      %p99 = scmp.eq.s32.totalorder %s14, 2
      %p100 = scmp.ne.s32.totalorder %s95, %s97
      %p101 = scmp.eq.s32.totalorder %s14, 0
      %p102 = por %p100, %p101
      %p103 = scmp.ne.s32.totalorder %s95, %s97
      %p104 = scmp.eq.s32.totalorder %s19, 2
      %p105 = por %p103, %p104
      %p106 = scmp.ne.s32.totalorder %s97, %s98
      %p107 = scmp.eq.s32.totalorder %s19, 0
      %p108 = por %p106, %p107
      %p109 = scmp.ne.s32.totalorder %s97, %s98
      %p110 = scmp.eq.s32.totalorder %s20, 2
      %p111 = por %p109, %p110
      %p113 = scmp.ne.s32.totalorder %s98, %s112
      %p114 = scmp.eq.s32.totalorder %s20, 0
      %p115 = por %p113, %p114
      %s117 = sadd.s32 %s116, 1
      %p120 = scmp.eq.s32.totalorder %s14, 2
      %p121 = scmp.ne.s32.totalorder %s116, %s118
      %p122 = scmp.eq.s32.totalorder %s14, 0
      %p123 = por %p121, %p122
      %p124 = scmp.ne.s32.totalorder %s116, %s118
      %p125 = scmp.eq.s32.totalorder %s19, 2
      %p126 = por %p124, %p125
      %p127 = scmp.ne.s32.totalorder %s118, %s119
      %p128 = scmp.eq.s32.totalorder %s19, 0
      %p129 = por %p127, %p128
      %p130 = scmp.ne.s32.totalorder %s118, %s119
      %p131 = scmp.eq.s32.totalorder %s20, 2
      %p132 = por %p130, %p131
      %p134 = scmp.ne.s32.totalorder %s119, %s133
      %p135 = scmp.eq.s32.totalorder %s20, 0
      %p136 = por %p134, %p135
      %s137 = ssub.s32 %s14, %s21
      %p138 = scmp.eq.s32.totalorder %s137, 0
      %s140 = sadd.s32 %s139, 1
      %s141 = scalar_select %p138, %s139, %s140
      %p144 = pneg %p138
      %p145 = scmp.eq.s32.totalorder %s14, 2
      %p146 = por %p144, %p145
      %p147 = scmp.ne.s32.totalorder %s139, %s142
      %p148 = scmp.eq.s32.totalorder %s14, 0
      %p149 = por %p147, %p148
      %p150 = scmp.ne.s32.totalorder %s139, %s142
      %p151 = scmp.eq.s32.totalorder %s19, 2
      %p152 = por %p150, %p151
      %p153 = scmp.ne.s32.totalorder %s142, %s143
      %p154 = scmp.eq.s32.totalorder %s19, 0
      %p155 = por %p153, %p154
      %p156 = scmp.ne.s32.totalorder %s142, %s143
      %p157 = scmp.eq.s32.totalorder %s20, 2
      %p158 = por %p156, %p157
      %p160 = scmp.ne.s32.totalorder %s143, %s159
      %p161 = scmp.eq.s32.totalorder %s20, 0
      %p162 = por %p160, %p161
      %s164 = sadd.s32 %s163, 1
      %p167 = scmp.eq.s32.totalorder %s14, 2
      %p168 = scmp.ne.s32.totalorder %s163, %s165
      %p169 = scmp.eq.s32.totalorder %s14, 0
      %p170 = por %p168, %p169
      %p171 = scmp.ne.s32.totalorder %s163, %s165
      %p172 = scmp.eq.s32.totalorder %s19, 2
      %p173 = por %p171, %p172
      %p174 = scmp.ne.s32.totalorder %s165, %s166
      %p175 = scmp.eq.s32.totalorder %s19, 0
      %p176 = por %p174, %p175
      %p177 = scmp.ne.s32.totalorder %s165, %s166
      %p178 = scmp.eq.s32.totalorder %s20, 2
      %p179 = por %p177, %p178
      %p181 = scmp.ne.s32.totalorder %s166, %s180
      %p182 = scmp.eq.s32.totalorder %s20, 0
      %p183 = por %p181, %p182
      %p184 = scmp.le.s32.totalorder 1, %s14
      %p185 = scmp.lt.s32.totalorder %s14, 4
      %p186 = pnand %p184, %p185
      %p187 = pneg %p186
      // Predicated region
      $region9: #{actor_rollout.1} parent=5 // pred_check
        _
      $region10: #{actor_rollout.1} parent=5 // pred_check_branch
        %189 = sbr.rel (%p186) target = $region12
      $region11: #{actor_rollout.1} parent=5 // pred_region
        %s190 = ssub.s32 %s14, 1
        // Predicated region
        $region13: #{actor_rollout.1} parent=11 // pred_check
          %p191 = pneg %p87
        $region14: #{actor_rollout.1} parent=11 // pred_check_branch
          %193 = sbr.rel (%p191) target = $region16
        $region15: #{actor_rollout.1} parent=11 // pred_region
          _
        $region16: #{actor_rollout.1} parent=11 // pred_fallthru
          _
        // Predicated region
        $region17: #{actor_rollout.1} parent=11 // pred_check
          %p194 = pneg %p108
        $region18: #{actor_rollout.1} parent=11 // pred_check_branch
          %196 = sbr.rel (%p194) target = $region20
        $region19: #{actor_rollout.1} parent=11 // pred_region
          %s198 = ssub.s32 32768, 32768
          %199 = vsyncadd [#allocation3], %s198
          %s200 = sshll.u32 [#allocation2], 4
          %s201 = int_to_ptr.vmem [resolvable:$true] %s200
          %206 = dma.hbm_to_vmem [thread:$0]  %s3, 32768, %s201, [#allocation3], 512, 512, 32
        $region20: #{actor_rollout.1} parent=11 // pred_fallthru
          _
        // Predicated region
        $region21: #{actor_rollout.1} parent=11 // pred_check
          %p207 = pneg %p129
        $region22: #{actor_rollout.1} parent=11 // pred_check_branch
          %209 = sbr.rel (%p207) target = $region24
        $region23: #{actor_rollout.1} parent=11 // pred_region
          _
        $region24: #{actor_rollout.1} parent=11 // pred_fallthru
          _
      $region12: #{actor_rollout.1} parent=5 // pred_fallthru
        _
      %p210 = scmp.lt.s32.totalorder %s14, 3
      // Predicated region
      $region25: #{actor_rollout.1} parent=5 // pred_check
        %p211 = pneg %p210
      $region26: #{actor_rollout.1} parent=5 // pred_check_branch
        %213 = sbr.rel (%p211) target = $region28
      $region27: #{actor_rollout.1} parent=5 // pred_region
        // Predicated region
        $region29: #{actor_rollout.1} parent=27 // pred_check
          %p214 = pneg %p34
        $region30: #{actor_rollout.1} parent=27 // pred_check_branch
          %216 = sbr.rel (%p214) target = $region32
        $region31: #{actor_rollout.1} parent=27 // pred_region
          %s217 = smul.u32 3, %s14
          %p218 = scmp.lt.s32.totalorder %s217, 8
          %s219 = scalar_select %p218, %s217, 8
          %s220 = smul.addr %s219, 8
          %s221 = scalar_lea.vmem %s0, %s220
          %s222 = smul.u32 3, %s14
        $region32: #{actor_rollout.1} parent=27 // pred_fallthru
          _
        // Predicated region
        $region33: #{actor_rollout.1} parent=27 // pred_check
          %p223 = pneg %p60
        $region34: #{actor_rollout.1} parent=27 // pred_check_branch
          %225 = sbr.rel (%p223) target = $region36
        $region35: #{actor_rollout.1} parent=27 // pred_region
          %s226 = smul.u32 3, %s14
          %p227 = scmp.lt.s32.totalorder %s226, 8
          %s228 = scalar_select %p227, %s226, 8
          %s229 = smul.addr %s228, 8
          %s230 = scalar_lea.vmem %s1, %s229
          %s231 = smul.u32 3, %s14
        $region36: #{actor_rollout.1} parent=27 // pred_fallthru
          _
      $region28: #{actor_rollout.1} parent=5 // pred_fallthru
        _
      %p232 = scmp.le.s32.totalorder 1, %s14
      %p233 = scmp.lt.s32.totalorder %s14, 4
      %p234 = pnand %p232, %p233
      %p235 = pneg %p234
      // Predicated region
      $region37: #{actor_rollout.1} parent=5 // pred_check
        _
      $region38: #{actor_rollout.1} parent=5 // pred_check_branch
        %237 = sbr.rel (%p234) target = $region40
      $region39: #{actor_rollout.1} parent=5 // pred_region
        %s238 = ssub.s32 %s14, 1
        // Predicated region
        $region41: #{actor_rollout.1} parent=39 // pred_check
          %p239 = pneg %p108
        $region42: #{actor_rollout.1} parent=39 // pred_check_branch
          %241 = sbr.rel (%p239) target = $region44
        $region43: #{actor_rollout.1} parent=39 // pred_region
          %242 = dma.done [#allocation3], 32768
        $region44: #{actor_rollout.1} parent=39 // pred_fallthru
          _
        %s243 = smul.u32 3, %s19
        %p244 = scmp.lt.s32.totalorder %s243, 8
        %s245 = scalar_select %p244, %s243, 8
        %s246 = smul.addr %s245, 8
        %s247 = scalar_lea.vmem %s0, %s246
        %p248 = pneg %p40
        %p249 = pneg %p37
        %s250 = smul.u32 3, %s19
        %p251 = scmp.lt.s32.totalorder %s250, 8
        %s252 = scalar_select %p251, %s250, 8
        %s253 = smul.addr %s252, 8
        %s254 = scalar_lea.vmem %s1, %s253
        %p255 = pneg %p66
        %p256 = pneg %p63
        %p257 = pneg %p87
        %p258 = pneg %p84
        %p259 = pneg %p108
        %p260 = pneg %p105
        %p261 = pneg %p129
        %p262 = pneg %p126
        %p263 = pneg %p155
        %p264 = pneg %p152
        %s265 = smul.u32 3, %s19
        %p266 = scmp.lt.s32.totalorder %s265, 8
        %s267 = scalar_select %p266, %s265, 8
        %s268 = smul.addr %s267, 8
        %s269 = scalar_lea.vmem %s5, %s268
        %p270 = pneg %p176
        %p271 = pneg %p173
        %s272 = smul.u32 3, %s19
        %p273 = scmp.lt.s32.totalorder %s272, 8
        %s274 = scalar_select %p273, %s272, 8
        %s275 = smul.addr %s274, 8
        %s276 = scalar_lea.vmem %s0, %s275
        %s277 = smul.u32 3, %s19
        %s278 = smul.u32 3, %s19
        %p279 = scmp.lt.s32.totalorder %s278, 8
        %s280 = scalar_select %p279, %s278, 8
        %s281 = smul.addr %s280, 8
        %s282 = scalar_lea.vmem %s1, %s281
        %s283 = smul.u32 3, %s19
        %s284 = smul.u32 3, %s19
        %p285 = scmp.lt.s32.totalorder %s284, 8
        %s286 = scalar_select %p285, %s284, 8
        %s287 = smul.addr %s286, 8
        %s288 = scalar_lea.vmem %s5, %s287
        %s289 = smul.u32 3, %s19
        %p290 = scmp.eq.s32.totalorder %s19, 0
        // Predicated region
        $region45: #{actor_rollout.1} parent=39 // pred_check
          %p291 = pneg %p290
        $region46: #{actor_rollout.1} parent=39 // pred_check_branch
          %293 = sbr.rel (%p291) target = $region48
        $region47: #{actor_rollout.1} parent=39 // pred_region
          %v294 = vld [vmem:[%s2] sm:$0xff]
          %295 = vst [vmem:[%s6] sm:$0xff] %v294
        $region48: #{actor_rollout.1} parent=39 // pred_fallthru
          _
        %v296 = vld [vmem:[#allocation2] sm:$0xff]
        %v297 = vld [vmem:[#allocation2 + $0x20] sm:$0xff]
        %v298 = vld [vmem:[#allocation2 + $0x40] sm:$0xff]
        %v299 = vld [vmem:[#allocation2 + $0x60] sm:$0xff]
        %v300 = vld [vmem:[#allocation2 + $0x80] sm:$0xff]
        %v301 = vld [vmem:[#allocation2 + $0xa0] sm:$0xff]
        %v302 = vld [vmem:[#allocation2 + $0xc0] sm:$0xff]
        %v303 = vld [vmem:[#allocation2 + $0xe0] sm:$0xff]
        %v304 = vld [vmem:[#allocation2 + $0x100] sm:$0xff]
        %v305 = vld [vmem:[#allocation2 + $0x120] sm:$0xff]
        %v306 = vld [vmem:[#allocation2 + $0x140] sm:$0xff]
        %v307 = vld [vmem:[#allocation2 + $0x160] sm:$0xff]
        %v308 = vld [vmem:[#allocation2 + $0x180] sm:$0xff]
        %v309 = vld [vmem:[#allocation2 + $0x1a0] sm:$0xff]
        %v310 = vld [vmem:[#allocation2 + $0x1c0] sm:$0xff]
        %v311 = vld [vmem:[#allocation2 + $0x1e0] sm:$0xff]
        %v312 = vld [vmem:[#allocation2 + $0x200] sm:$0xff]
        %v313 = vld [vmem:[#allocation2 + $0x208] sm:$0xff]
        %v314 = vld [vmem:[#allocation2 + $0x210] sm:$0xff]
        %v315 = vld [vmem:[#allocation2 + $0x218] sm:$0xff]
        %v316 = vld [vmem:[#allocation2 + $0x220] sm:$0xff]
        %v317 = vld [vmem:[#allocation2 + $0x228] sm:$0xff]
        %v318 = vld [vmem:[#allocation2 + $0x230] sm:$0xff]
        %v319 = vld [vmem:[#allocation2 + $0x238] sm:$0xff]
        %v320 = vld [vmem:[#allocation2 + $0x240] sm:$0xff]
        %v321 = vld [vmem:[#allocation2 + $0x248] sm:$0xff]
        %v322 = vld [vmem:[#allocation2 + $0x250] sm:$0xff]
        %v323 = vld [vmem:[#allocation2 + $0x258] sm:$0xff]
        %v324 = vld [vmem:[#allocation2 + $0x260] sm:$0xff]
        %v325 = vld [vmem:[#allocation2 + $0x268] sm:$0xff]
        %v326 = vld [vmem:[#allocation2 + $0x270] sm:$0xff]
        %v327 = vld [vmem:[#allocation2 + $0x278] sm:$0xff]
        %v328 = vld [vmem:[#allocation2 + $0x280] sm:$0xff]
        %v329 = vld [vmem:[#allocation2 + $0x288] sm:$0xff]
        %v330 = vld [vmem:[#allocation2 + $0x290] sm:$0xff]
        %v331 = vld [vmem:[#allocation2 + $0x298] sm:$0xff]
        %v332 = vld [vmem:[#allocation2 + $0x2a0] sm:$0xff]
        %v333 = vld [vmem:[#allocation2 + $0x2a8] sm:$0xff]
        %v334 = vld [vmem:[#allocation2 + $0x2b0] sm:$0xff]
        %v335 = vld [vmem:[#allocation2 + $0x2b8] sm:$0xff]
        %v336 = vld [vmem:[#allocation2 + $0x2c0] sm:$0xff]
        %v337 = vld [vmem:[#allocation2 + $0x2c8] sm:$0xff]
        %v338 = vld [vmem:[#allocation2 + $0x2d0] sm:$0xff]
        %v339 = vld [vmem:[#allocation2 + $0x2d8] sm:$0xff]
        %v340 = vld [vmem:[#allocation2 + $0x2e0] sm:$0xff]
        %v341 = vld [vmem:[#allocation2 + $0x2e8] sm:$0xff]
        %v342 = vld [vmem:[#allocation2 + $0x2f0] sm:$0xff]
        %v343 = vld [vmem:[#allocation2 + $0x2f8] sm:$0xff]
        %v344 = vld [vmem:[#allocation2 + $0x300] sm:$0xff]
        %v345 = vld [vmem:[#allocation2 + $0x308] sm:$0xff]
        %v346 = vld [vmem:[#allocation2 + $0x310] sm:$0xff]
        %v347 = vld [vmem:[#allocation2 + $0x318] sm:$0xff]
        %v348 = vld [vmem:[#allocation2 + $0x320] sm:$0xff]
        %v349 = vld [vmem:[#allocation2 + $0x328] sm:$0xff]
        %v350 = vld [vmem:[#allocation2 + $0x330] sm:$0xff]
        %v351 = vld [vmem:[#allocation2 + $0x338] sm:$0xff]
        %v352 = vld [vmem:[#allocation2 + $0x340] sm:$0xff]
        %v353 = vld [vmem:[#allocation2 + $0x348] sm:$0xff]
        %v354 = vld [vmem:[#allocation2 + $0x350] sm:$0xff]
        %v355 = vld [vmem:[#allocation2 + $0x358] sm:$0xff]
        %v356 = vld [vmem:[#allocation2 + $0x360] sm:$0xff]
        %v357 = vld [vmem:[#allocation2 + $0x368] sm:$0xff]
        %v358 = vld [vmem:[#allocation2 + $0x370] sm:$0xff]
        %v359 = vld [vmem:[#allocation2 + $0x378] sm:$0xff]
        %v360 = vld [vmem:[#allocation2 + $0x380] sm:$0xff]
        %v361 = vld [vmem:[#allocation2 + $0x388] sm:$0xff]
        %v362 = vld [vmem:[#allocation2 + $0x390] sm:$0xff]
        %v363 = vld [vmem:[#allocation2 + $0x398] sm:$0xff]
        %v364 = vld [vmem:[#allocation2 + $0x3a0] sm:$0xff]
        %v365 = vld [vmem:[#allocation2 + $0x3a8] sm:$0xff]
        %v366 = vld [vmem:[#allocation2 + $0x3b0] sm:$0xff]
        %v367 = vld [vmem:[#allocation2 + $0x3b8] sm:$0xff]
        %v368 = vld [vmem:[#allocation2 + $0x3c0] sm:$0xff]
        %v369 = vld [vmem:[#allocation2 + $0x3c8] sm:$0xff]
        %v370 = vld [vmem:[#allocation2 + $0x3d0] sm:$0xff]
        %v371 = vld [vmem:[#allocation2 + $0x3d8] sm:$0xff]
        %v372 = vld [vmem:[#allocation2 + $0x3e0] sm:$0xff]
        %v373 = vld [vmem:[#allocation2 + $0x3e8] sm:$0xff]
        %v374 = vld [vmem:[#allocation2 + $0x3f0] sm:$0xff]
        %v375 = vld [vmem:[#allocation2 + $0x3f8] sm:$0xff]
        %v376 = vld [vmem:[#allocation2 + $0x400] sm:$0xff]
        %v377 = vld [vmem:[#allocation2 + $0x408] sm:$0xff]
        %v378 = vld [vmem:[#allocation2 + $0x410] sm:$0xff]
        %v379 = vld [vmem:[#allocation2 + $0x418] sm:$0xff]
        %v380 = vld [vmem:[#allocation2 + $0x420] sm:$0xff]
        %v381 = vld [vmem:[#allocation2 + $0x428] sm:$0xff]
        %v382 = vld [vmem:[#allocation2 + $0x430] sm:$0xff]
        %v383 = vld [vmem:[#allocation2 + $0x438] sm:$0xff]
        %v384 = vld [vmem:[#allocation2 + $0x440] sm:$0xff]
        %v385 = vld [vmem:[#allocation2 + $0x448] sm:$0xff]
        %v386 = vld [vmem:[#allocation2 + $0x450] sm:$0xff]
        %v387 = vld [vmem:[#allocation2 + $0x458] sm:$0xff]
        %v388 = vld [vmem:[#allocation2 + $0x460] sm:$0xff]
        %v389 = vld [vmem:[#allocation2 + $0x468] sm:$0xff]
        %v390 = vld [vmem:[#allocation2 + $0x470] sm:$0xff]
        %v391 = vld [vmem:[#allocation2 + $0x478] sm:$0xff]
        %v392 = vld [vmem:[#allocation2 + $0x480] sm:$0xff]
        %v393 = vld [vmem:[#allocation2 + $0x488] sm:$0xff]
        %v394 = vld [vmem:[#allocation2 + $0x490] sm:$0xff]
        %v395 = vld [vmem:[#allocation2 + $0x498] sm:$0xff]
        %v396 = vld [vmem:[#allocation2 + $0x4a0] sm:$0xff]
        %v397 = vld [vmem:[#allocation2 + $0x4a8] sm:$0xff]
        %v398 = vld [vmem:[#allocation2 + $0x4b0] sm:$0xff]
        %v399 = vld [vmem:[#allocation2 + $0x4b8] sm:$0xff]
        %v400 = vld [vmem:[#allocation2 + $0x4c0] sm:$0xff]
        %v401 = vld [vmem:[#allocation2 + $0x4c8] sm:$0xff]
        %v402 = vld [vmem:[#allocation2 + $0x4d0] sm:$0xff]
        %v403 = vld [vmem:[#allocation2 + $0x4d8] sm:$0xff]
        %v404 = vld [vmem:[#allocation2 + $0x4e0] sm:$0xff]
        %v405 = vld [vmem:[#allocation2 + $0x4e8] sm:$0xff]
        %v406 = vld [vmem:[#allocation2 + $0x4f0] sm:$0xff]
        %v407 = vld [vmem:[#allocation2 + $0x4f8] sm:$0xff]
        %v408 = vld [vmem:[#allocation2 + $0x500] sm:$0xff]
        %v409 = vld [vmem:[#allocation2 + $0x508] sm:$0xff]
        %v410 = vld [vmem:[#allocation2 + $0x510] sm:$0xff]
        %v411 = vld [vmem:[#allocation2 + $0x518] sm:$0xff]
        %v412 = vld [vmem:[#allocation2 + $0x520] sm:$0xff]
        %v413 = vld [vmem:[#allocation2 + $0x528] sm:$0xff]
        %v414 = vld [vmem:[#allocation2 + $0x530] sm:$0xff]
        %v415 = vld [vmem:[#allocation2 + $0x538] sm:$0xff]
        %v416 = vld [vmem:[#allocation2 + $0x540] sm:$0xff]
        %v417 = vld [vmem:[#allocation2 + $0x548] sm:$0xff]
        %v418 = vld [vmem:[#allocation2 + $0x550] sm:$0xff]
        %v419 = vld [vmem:[#allocation2 + $0x558] sm:$0xff]
        %v420 = vld [vmem:[#allocation2 + $0x560] sm:$0xff]
        %v421 = vld [vmem:[#allocation2 + $0x568] sm:$0xff]
        %v422 = vld [vmem:[#allocation2 + $0x570] sm:$0xff]
        %v423 = vld [vmem:[#allocation2 + $0x578] sm:$0xff]
        %v424 = vld [vmem:[#allocation2 + $0x580] sm:$0xff]
        %v425 = vld [vmem:[#allocation2 + $0x588] sm:$0xff]
        %v426 = vld [vmem:[#allocation2 + $0x590] sm:$0xff]
        %v427 = vld [vmem:[#allocation2 + $0x598] sm:$0xff]
        %v428 = vld [vmem:[#allocation2 + $0x5a0] sm:$0xff]
        %v429 = vld [vmem:[#allocation2 + $0x5a8] sm:$0xff]
        %v430 = vld [vmem:[#allocation2 + $0x5b0] sm:$0xff]
        %v431 = vld [vmem:[#allocation2 + $0x5b8] sm:$0xff]
        %v432 = vld [vmem:[#allocation2 + $0x5c0] sm:$0xff]
        %v433 = vld [vmem:[#allocation2 + $0x5c8] sm:$0xff]
        %v434 = vld [vmem:[#allocation2 + $0x5d0] sm:$0xff]
        %v435 = vld [vmem:[#allocation2 + $0x5d8] sm:$0xff]
        %v436 = vld [vmem:[#allocation2 + $0x5e0] sm:$0xff]
        %v437 = vld [vmem:[#allocation2 + $0x5e8] sm:$0xff]
        %v438 = vld [vmem:[#allocation2 + $0x5f0] sm:$0xff]
        %v439 = vld [vmem:[#allocation2 + $0x5f8] sm:$0xff]
        %v440 = vld [vmem:[#allocation2 + $0x600] sm:$0xff]
        %v441 = vld [vmem:[#allocation2 + $0x620] sm:$0xff]
        %v442 = vld [vmem:[#allocation2 + $0x640] sm:$0xff]
        %v443 = vld [vmem:[#allocation2 + $0x660] sm:$0xff]
        %v444 = vld [vmem:[#allocation2 + $0x680] sm:$0xff]
        %v445 = vld [vmem:[#allocation2 + $0x6a0] sm:$0xff]
        %v446 = vld [vmem:[#allocation2 + $0x6c0] sm:$0xff]
        %v447 = vld [vmem:[#allocation2 + $0x6e0] sm:$0xff]
        %v448 = vld [vmem:[#allocation2 + $0x700] sm:$0xff]
        %v449 = vld [vmem:[#allocation2 + $0x720] sm:$0xff]
        %v450 = vld [vmem:[#allocation2 + $0x740] sm:$0xff]
        %v451 = vld [vmem:[#allocation2 + $0x760] sm:$0xff]
        %v452 = vld [vmem:[#allocation2 + $0x780] sm:$0xff]
        %v453 = vld [vmem:[#allocation2 + $0x7a0] sm:$0xff]
        %v454 = vld [vmem:[#allocation2 + $0x7c0] sm:$0xff]
        %v455 = vld [vmem:[#allocation2 + $0x7e0] sm:$0xff]
        %v456 = vld [vmem:[%s4] ss:$0 sm:$0xff]
        %s457 = scalar_lea.vmem %s4, 1
        %v458 = vld [vmem:[%s457] ss:$8 sm:$0xf]
        %v459 = vld [vmem:[%s4 + $0x2] ss:$0 sm:$0xff]
        %s460 = smul.u32 %s19, 3
        %v461 = vld [vmem:[%s6] sm:$0xff]
        %v462 = vld [vmem:[%s276] sm:$0xff]
        %463 = vmatprep.subr.mxu0 0.0
        %464 = vmatpush1.msra.mxu0 %v296
        %465 = vmatprep.subr.mxu0 0.0
        %466 = vmatpush1.msra.mxu0 %v297
        %467 = vmatprep.subr.mxu0 0.0
        %468 = vmatpush1.msra.mxu0 %v298
        %469 = vmatprep.subr.mxu0 0.0
        %470 = vmatpush1.msra.mxu0 %v299
        %471 = vmatprep.subr.mxu0 0.0
        %472 = vmatpush1.msra.mxu0 %v300
        %473 = vmatprep.subr.mxu0 0.0
        %474 = vmatpush1.msra.mxu0 %v301
        %475 = vmatprep.subr.mxu0 0.0
        %476 = vmatpush1.msra.mxu0 %v302
        %477 = vmatprep.subr.mxu0 0.0
        %478 = vmatpush1.msra.mxu0 %v303
        %479 = vmatprep.subr.mxu0 0.0
        %480 = vmatpush1.msra.mxu0 %v304
        %481 = vmatprep.subr.mxu0 0.0
        %482 = vmatpush1.msra.mxu0 %v305
        %483 = vmatprep.subr.mxu0 0.0
        %484 = vmatpush1.msra.mxu0 %v306
        %485 = vmatprep.subr.mxu0 0.0
        %486 = vmatpush1.msra.mxu0 %v307
        %487 = vmatprep.subr.mxu0 0.0
        %488 = vmatpush1.msra.mxu0 %v308
        %489 = vmatprep.subr.mxu0 0.0
        %490 = vmatpush1.msra.mxu0 %v309
        %491 = vmatprep.subr.mxu0 0.0
        %492 = vmatpush1.msra.mxu0 %v310
        %493 = vmatprep.subr.mxu0 0.0
        %494 = vmatpush1.msra.mxu0 %v311
        %495 = vmatprep.subr.mxu0 0.0
        %496 = vmatpush1.msra.mxu0 0.0
        %497 = vmatprep.subr.mxu0 0.0
        %498 = vmatpush1.msra.mxu0 0.0
        %499 = vmatprep.subr.mxu0 0.0
        %500 = vmatpush1.msra.mxu0 0.0
        %501 = vmatprep.subr.mxu0 0.0
        %502 = vmatpush1.msra.mxu0 0.0
        %503 = vmatprep.subr.mxu0 0.0
        %504 = vmatpush1.msra.mxu0 0.0
        %505 = vmatprep.subr.mxu0 0.0
        %506 = vmatpush1.msra.mxu0 0.0
        %507 = vmatprep.subr.mxu0 0.0
        %508 = vmatpush1.msra.mxu0 0.0
        %509 = vmatprep.subr.mxu0 0.0
        %510 = vmatpush1.msra.mxu0 0.0
        %511 = vmatprep.subr.mxu0 0.0
        %512 = vmatpush1.msra.mxu0 0.0
        %513 = vmatprep.subr.mxu0 0.0
        %514 = vmatpush1.msra.mxu0 0.0
        %515 = vmatprep.subr.mxu0 0.0
        %516 = vmatpush1.msra.mxu0 0.0
        %517 = vmatprep.subr.mxu0 0.0
        %518 = vmatpush1.msra.mxu0 0.0
        %519 = vmatprep.subr.mxu0 0.0
        %520 = vmatpush1.msra.mxu0 0.0
        %521 = vmatprep.subr.mxu0 0.0
        %522 = vmatpush1.msra.mxu0 0.0
        %523 = vmatprep.subr.mxu0 0.0
        %524 = vmatpush1.msra.mxu0 0.0
        %525 = vmatprep.subr.mxu0 0.0
        %526 = vmatpush1.msra.mxu0 0.0
        %527 = vmatprep.mubr.f32.mxu0 0.0
        %528 = vmatmul.mubr.f32.gmra.mrb[0].mxu0 %v462
        %v529 = vpop.f32.mrb[0].mxu0
        %v530 = vadd.f32 %v456, %v529
        %v531 = vpop.f32.mrb[0].mxu0
        %532 = vdwg.mxu0
        %v533 = vmax.f32 %v530, 0.0
        %v535 = vlaneseq
        %v536 = vshrl.u32 %v535, 7
        %v537 = vsub.s32 0, %v536
        %v538 = vrot.slane %v458, %v537
        %v539 = vlaneseq
        %v540 = vshrl.u32 %v539, 7
        %v541 = vsub.s32 1, %v540
        %v542 = vrot.slane %v458, %v541
        %v543 = vlaneseq
        %v544 = vshrl.u32 %v543, 7
        %v545 = vsub.s32 2, %v544
        %v546 = vrot.slane %v458, %v545
        %v547 = vlaneseq
        %v548 = vshrl.u32 %v547, 7
        %v549 = vsub.s32 3, %v548
        %v550 = vrot.slane %v458, %v549
        %555 = vmatprep.subr.mxu0 %v313
        %556 = vmatpush1.msra.mxu0 %v312
        %557 = vmatprep.subr.mxu0 %v317
        %558 = vmatpush1.msra.mxu0 %v316
        %559 = vmatprep.subr.mxu0 %v321
        %560 = vmatpush1.msra.mxu0 %v320
        %561 = vmatprep.subr.mxu0 %v325
        %562 = vmatpush1.msra.mxu0 %v324
        %563 = vmatprep.subr.mxu0 %v329
        %564 = vmatpush1.msra.mxu0 %v328
        %565 = vmatprep.subr.mxu0 %v333
        %566 = vmatpush1.msra.mxu0 %v332
        %567 = vmatprep.subr.mxu0 %v337
        %568 = vmatpush1.msra.mxu0 %v336
        %569 = vmatprep.subr.mxu0 %v341
        %570 = vmatpush1.msra.mxu0 %v340
        %571 = vmatprep.subr.mxu0 %v345
        %572 = vmatpush1.msra.mxu0 %v344
        %573 = vmatprep.subr.mxu0 %v349
        %574 = vmatpush1.msra.mxu0 %v348
        %575 = vmatprep.subr.mxu0 %v353
        %576 = vmatpush1.msra.mxu0 %v352
        %577 = vmatprep.subr.mxu0 %v357
        %578 = vmatpush1.msra.mxu0 %v356
        %579 = vmatprep.subr.mxu0 %v361
        %580 = vmatpush1.msra.mxu0 %v360
        %581 = vmatprep.subr.mxu0 %v365
        %582 = vmatpush1.msra.mxu0 %v364
        %583 = vmatprep.subr.mxu0 %v369
        %584 = vmatpush1.msra.mxu0 %v368
        %585 = vmatprep.subr.mxu0 %v373
        %586 = vmatpush1.msra.mxu0 %v372
        %587 = vmatprep.subr.mxu0 %v377
        %588 = vmatpush1.msra.mxu0 %v376
        %589 = vmatprep.subr.mxu0 %v381
        %590 = vmatpush1.msra.mxu0 %v380
        %591 = vmatprep.subr.mxu0 %v385
        %592 = vmatpush1.msra.mxu0 %v384
        %593 = vmatprep.subr.mxu0 %v389
        %594 = vmatpush1.msra.mxu0 %v388
        %595 = vmatprep.subr.mxu0 %v393
        %596 = vmatpush1.msra.mxu0 %v392
        %597 = vmatprep.subr.mxu0 %v397
        %598 = vmatpush1.msra.mxu0 %v396
        %599 = vmatprep.subr.mxu0 %v401
        %600 = vmatpush1.msra.mxu0 %v400
        %601 = vmatprep.subr.mxu0 %v405
        %602 = vmatpush1.msra.mxu0 %v404
        %603 = vmatprep.subr.mxu0 %v409
        %604 = vmatpush1.msra.mxu0 %v408
        %605 = vmatprep.subr.mxu0 %v413
        %606 = vmatpush1.msra.mxu0 %v412
        %607 = vmatprep.subr.mxu0 %v417
        %608 = vmatpush1.msra.mxu0 %v416
        %609 = vmatprep.subr.mxu0 %v421
        %610 = vmatpush1.msra.mxu0 %v420
        %611 = vmatprep.subr.mxu0 %v425
        %612 = vmatpush1.msra.mxu0 %v424
        %613 = vmatprep.subr.mxu0 %v429
        %614 = vmatpush1.msra.mxu0 %v428
        %615 = vmatprep.subr.mxu0 %v433
        %616 = vmatpush1.msra.mxu0 %v432
        %617 = vmatprep.subr.mxu0 %v437
        %618 = vmatpush1.msra.mxu0 %v436
        %619 = vmatprep.mubr.f32.mxu0 %v461
        %620 = vmatmul.mubr.f32.gmra.mrb[0].mxu0 %v533
        %v621 = vpop.f32.mrb[0].mxu0
        %v622 = vadd.f32 %v538, %v621
        %v623 = vpop.f32.mrb[0].mxu0
        %v624 = vadd.f32 %v542, %v623
        %625 = vdwg.mxu0
        %626 = vmatprep.subr.mxu0 %v315
        %627 = vmatpush1.msra.mxu0 %v314
        %628 = vmatprep.subr.mxu0 %v319
        %629 = vmatpush1.msra.mxu0 %v318
        %630 = vmatprep.subr.mxu0 %v323
        %631 = vmatpush1.msra.mxu0 %v322
        %632 = vmatprep.subr.mxu0 %v327
        %633 = vmatpush1.msra.mxu0 %v326
        %634 = vmatprep.subr.mxu0 %v331
        %635 = vmatpush1.msra.mxu0 %v330
        %636 = vmatprep.subr.mxu0 %v335
        %637 = vmatpush1.msra.mxu0 %v334
        %638 = vmatprep.subr.mxu0 %v339
        %639 = vmatpush1.msra.mxu0 %v338
        %640 = vmatprep.subr.mxu0 %v343
        %641 = vmatpush1.msra.mxu0 %v342
        %642 = vmatprep.subr.mxu0 %v347
        %643 = vmatpush1.msra.mxu0 %v346
        %644 = vmatprep.subr.mxu0 %v351
        %645 = vmatpush1.msra.mxu0 %v350
        %646 = vmatprep.subr.mxu0 %v355
        %647 = vmatpush1.msra.mxu0 %v354
        %648 = vmatprep.subr.mxu0 %v359
        %649 = vmatpush1.msra.mxu0 %v358
        %650 = vmatprep.subr.mxu0 %v363
        %651 = vmatpush1.msra.mxu0 %v362
        %652 = vmatprep.subr.mxu0 %v367
        %653 = vmatpush1.msra.mxu0 %v366
        %654 = vmatprep.subr.mxu0 %v371
        %655 = vmatpush1.msra.mxu0 %v370
        %656 = vmatprep.subr.mxu0 %v375
        %657 = vmatpush1.msra.mxu0 %v374
        %658 = vmatprep.subr.mxu0 %v379
        %659 = vmatpush1.msra.mxu0 %v378
        %660 = vmatprep.subr.mxu0 %v383
        %661 = vmatpush1.msra.mxu0 %v382
        %662 = vmatprep.subr.mxu0 %v387
        %663 = vmatpush1.msra.mxu0 %v386
        %664 = vmatprep.subr.mxu0 %v391
        %665 = vmatpush1.msra.mxu0 %v390
        %666 = vmatprep.subr.mxu0 %v395
        %667 = vmatpush1.msra.mxu0 %v394
        %668 = vmatprep.subr.mxu0 %v399
        %669 = vmatpush1.msra.mxu0 %v398
        %670 = vmatprep.subr.mxu0 %v403
        %671 = vmatpush1.msra.mxu0 %v402
        %672 = vmatprep.subr.mxu0 %v407
        %673 = vmatpush1.msra.mxu0 %v406
        %674 = vmatprep.subr.mxu0 %v411
        %675 = vmatpush1.msra.mxu0 %v410
        %676 = vmatprep.subr.mxu0 %v415
        %677 = vmatpush1.msra.mxu0 %v414
        %678 = vmatprep.subr.mxu0 %v419
        %679 = vmatpush1.msra.mxu0 %v418
        %680 = vmatprep.subr.mxu0 %v423
        %681 = vmatpush1.msra.mxu0 %v422
        %682 = vmatprep.subr.mxu0 %v427
        %683 = vmatpush1.msra.mxu0 %v426
        %684 = vmatprep.subr.mxu0 %v431
        %685 = vmatpush1.msra.mxu0 %v430
        %686 = vmatprep.subr.mxu0 %v435
        %687 = vmatpush1.msra.mxu0 %v434
        %688 = vmatprep.subr.mxu0 %v439
        %689 = vmatpush1.msra.mxu0 %v438
        %690 = vmatprep.mubr.f32.mxu0 %v461
        %691 = vmatmul.mubr.f32.gmra.mrb[0].mxu0 %v533
        %v692 = vpop.f32.mrb[0].mxu0
        %v693 = vadd.f32 %v546, %v692
        %v694 = vpop.f32.mrb[0].mxu0
        %v695 = vadd.f32 %v550, %v694
        %696 = vdwg.mxu0
        %v697 = vxor.u32 %v622, 2147483648
        %v698 = vmul.f32 %v697, 1.442695
        %v699 = vpow.pop %v698
        %v700 = vadd.f32 %v699, 1.0
        %v701 = vrcp.pop %v700
        %v702 = vmul.f32 1.0, %v701
        %v703 = vxor.u32 %v624, 2147483648
        %v704 = vmul.f32 %v703, 1.442695
        %v705 = vpow.pop %v704
        %v706 = vadd.f32 %v705, 1.0
        %v707 = vrcp.pop %v706
        %v708 = vmul.f32 1.0, %v707
        %v709 = vmul.f32 %v702, %v695
        %v710 = vadd.f32 %v693, %v709
        %v711 = vtanh.pop %v710
        %v712 = vsub.f32 1.0, %v708
        %v713 = vmul.f32 %v712, %v711
        %v714 = vmul.f32 %v708, %v461
        %v715 = vadd.f32 %v713, %v714
        %716 = vmatprep.subr.mxu0 0.0
        %717 = vmatpush1.msra.mxu0 %v440
        %718 = vmatprep.subr.mxu0 0.0
        %719 = vmatpush1.msra.mxu0 %v441
        %720 = vmatprep.subr.mxu0 0.0
        %721 = vmatpush1.msra.mxu0 %v442
        %722 = vmatprep.subr.mxu0 0.0
        %723 = vmatpush1.msra.mxu0 %v443
        %724 = vmatprep.subr.mxu0 0.0
        %725 = vmatpush1.msra.mxu0 %v444
        %726 = vmatprep.subr.mxu0 0.0
        %727 = vmatpush1.msra.mxu0 %v445
        %728 = vmatprep.subr.mxu0 0.0
        %729 = vmatpush1.msra.mxu0 %v446
        %730 = vmatprep.subr.mxu0 0.0
        %731 = vmatpush1.msra.mxu0 %v447
        %732 = vmatprep.subr.mxu0 0.0
        %733 = vmatpush1.msra.mxu0 %v448
        %734 = vmatprep.subr.mxu0 0.0
        %735 = vmatpush1.msra.mxu0 %v449
        %736 = vmatprep.subr.mxu0 0.0
        %737 = vmatpush1.msra.mxu0 %v450
        %738 = vmatprep.subr.mxu0 0.0
        %739 = vmatpush1.msra.mxu0 %v451
        %740 = vmatprep.subr.mxu0 0.0
        %741 = vmatpush1.msra.mxu0 %v452
        %742 = vmatprep.subr.mxu0 0.0
        %743 = vmatpush1.msra.mxu0 %v453
        %744 = vmatprep.subr.mxu0 0.0
        %745 = vmatpush1.msra.mxu0 %v454
        %746 = vmatprep.subr.mxu0 0.0
        %747 = vmatpush1.msra.mxu0 %v455
        %748 = vmatprep.subr.mxu0 0.0
        %749 = vmatpush1.msra.mxu0 0.0
        %750 = vmatprep.subr.mxu0 0.0
        %751 = vmatpush1.msra.mxu0 0.0
        %752 = vmatprep.subr.mxu0 0.0
        %753 = vmatpush1.msra.mxu0 0.0
        %754 = vmatprep.subr.mxu0 0.0
        %755 = vmatpush1.msra.mxu0 0.0
        %756 = vmatprep.subr.mxu0 0.0
        %757 = vmatpush1.msra.mxu0 0.0
        %758 = vmatprep.subr.mxu0 0.0
        %759 = vmatpush1.msra.mxu0 0.0
        %760 = vmatprep.subr.mxu0 0.0
        %761 = vmatpush1.msra.mxu0 0.0
        %762 = vmatprep.subr.mxu0 0.0
        %763 = vmatpush1.msra.mxu0 0.0
        %764 = vmatprep.subr.mxu0 0.0
        %765 = vmatpush1.msra.mxu0 0.0
        %766 = vmatprep.subr.mxu0 0.0
        %767 = vmatpush1.msra.mxu0 0.0
        %768 = vmatprep.subr.mxu0 0.0
        %769 = vmatpush1.msra.mxu0 0.0
        %770 = vmatprep.subr.mxu0 0.0
        %771 = vmatpush1.msra.mxu0 0.0
        %772 = vmatprep.subr.mxu0 0.0
        %773 = vmatpush1.msra.mxu0 0.0
        %774 = vmatprep.subr.mxu0 0.0
        %775 = vmatpush1.msra.mxu0 0.0
        %776 = vmatprep.subr.mxu0 0.0
        %777 = vmatpush1.msra.mxu0 0.0
        %778 = vmatprep.subr.mxu0 0.0
        %779 = vmatpush1.msra.mxu0 0.0
        %780 = vmatprep.mubr.f32.mxu0 0.0
        %781 = vmatmul.mubr.f32.gmra.mrb[0].mxu0 %v715
        %v782 = vpop.f32.mrb[0].mxu0
        %v783 = vadd.f32 %v459, %v782
        %v784 = vpop.f32.mrb[0].mxu0
        %785 = vdwg.mxu0
        %v786 = vld [vmem:[%s282] sm:$0xff]
        %vm787 = vcmp.eq.f32.partialorder %v786, 0.0
        %v788 = vsel %vm787, -1e+10, %v783
        %789 = vmax.xlane.f32.xlu0 %v788
        %v790 = vpop.xlane.xlu0 %789
        %v791 = vsub.f32 %v788, %v790
        %v792 = vmul.f32 %v791, 1.442695
        %v793 = vpow.pop %v792
        %794 = vadd.xlane.f32.xlu0 %v793
        %v795 = vpop.xlane.xlu0 %794
        %v796 = vrcp.pop %v795
        %v797 = vmul.f32 %v793, %v796
        %798 = vst [vmem:[%s288] sm:$0xff] %v797
        %p799 = scmp.lt.s32.totalorder %s460, 8
        %s800 = scalar_select %p799, 1, 0
        %v801 = vstv %s800
        %vm802 = vcmp.eq.s32.totalorder %v801, 1
        %v803 = vsel %vm802, %v715, %v461
        %804 = vst [vmem:[%s6] sm:$0xff] %v803
        %s805 = sadd.s32 %s460, 1
        %v806 = vld [vmem:[%s6] sm:$0xff]
        %s807 = scalar_lea.vmem %s276, 8
        %v808 = vld [vmem:[%s807] sm:$0xff]
        %809 = vmatprep.subr.mxu0 0.0
        %810 = vmatpush1.msra.mxu0 %v296
        %811 = vmatprep.subr.mxu0 0.0
        %812 = vmatpush1.msra.mxu0 %v297
        %813 = vmatprep.subr.mxu0 0.0
        %814 = vmatpush1.msra.mxu0 %v298
        %815 = vmatprep.subr.mxu0 0.0
        %816 = vmatpush1.msra.mxu0 %v299
        %817 = vmatprep.subr.mxu0 0.0
        %818 = vmatpush1.msra.mxu0 %v300
        %819 = vmatprep.subr.mxu0 0.0
        %820 = vmatpush1.msra.mxu0 %v301
        %821 = vmatprep.subr.mxu0 0.0
        %822 = vmatpush1.msra.mxu0 %v302
        %823 = vmatprep.subr.mxu0 0.0
        %824 = vmatpush1.msra.mxu0 %v303
        %825 = vmatprep.subr.mxu0 0.0
        %826 = vmatpush1.msra.mxu0 %v304
        %827 = vmatprep.subr.mxu0 0.0
        %828 = vmatpush1.msra.mxu0 %v305
        %829 = vmatprep.subr.mxu0 0.0
        %830 = vmatpush1.msra.mxu0 %v306
        %831 = vmatprep.subr.mxu0 0.0
        %832 = vmatpush1.msra.mxu0 %v307
        %833 = vmatprep.subr.mxu0 0.0
        %834 = vmatpush1.msra.mxu0 %v308
        %835 = vmatprep.subr.mxu0 0.0
        %836 = vmatpush1.msra.mxu0 %v309
        %837 = vmatprep.subr.mxu0 0.0
        %838 = vmatpush1.msra.mxu0 %v310
        %839 = vmatprep.subr.mxu0 0.0
        %840 = vmatpush1.msra.mxu0 %v311
        %841 = vmatprep.subr.mxu0 0.0
        %842 = vmatpush1.msra.mxu0 0.0
        %843 = vmatprep.subr.mxu0 0.0
        %844 = vmatpush1.msra.mxu0 0.0
        %845 = vmatprep.subr.mxu0 0.0
        %846 = vmatpush1.msra.mxu0 0.0
        %847 = vmatprep.subr.mxu0 0.0
        %848 = vmatpush1.msra.mxu0 0.0
        %849 = vmatprep.subr.mxu0 0.0
        %850 = vmatpush1.msra.mxu0 0.0
        %851 = vmatprep.subr.mxu0 0.0
        %852 = vmatpush1.msra.mxu0 0.0
        %853 = vmatprep.subr.mxu0 0.0
        %854 = vmatpush1.msra.mxu0 0.0
        %855 = vmatprep.subr.mxu0 0.0
        %856 = vmatpush1.msra.mxu0 0.0
        %857 = vmatprep.subr.mxu0 0.0
        %858 = vmatpush1.msra.mxu0 0.0
        %859 = vmatprep.subr.mxu0 0.0
        %860 = vmatpush1.msra.mxu0 0.0
        %861 = vmatprep.subr.mxu0 0.0
        %862 = vmatpush1.msra.mxu0 0.0
        %863 = vmatprep.subr.mxu0 0.0
        %864 = vmatpush1.msra.mxu0 0.0
        %865 = vmatprep.subr.mxu0 0.0
        %866 = vmatpush1.msra.mxu0 0.0
        %867 = vmatprep.subr.mxu0 0.0
        %868 = vmatpush1.msra.mxu0 0.0
        %869 = vmatprep.subr.mxu0 0.0
        %870 = vmatpush1.msra.mxu0 0.0
        %871 = vmatprep.subr.mxu0 0.0
        %872 = vmatpush1.msra.mxu0 0.0
        %873 = vmatprep.mubr.f32.mxu0 0.0
        %874 = vmatmul.mubr.f32.gmra.mrb[0].mxu0 %v808
        %v875 = vpop.f32.mrb[0].mxu0
        %v876 = vadd.f32 %v456, %v875
        %v877 = vpop.f32.mrb[0].mxu0
        %878 = vdwg.mxu0
        %v879 = vmax.f32 %v876, 0.0
        %880 = vmatprep.subr.mxu0 %v313
        %881 = vmatpush1.msra.mxu0 %v312
        %882 = vmatprep.subr.mxu0 %v317
        %883 = vmatpush1.msra.mxu0 %v316
        %884 = vmatprep.subr.mxu0 %v321
        %885 = vmatpush1.msra.mxu0 %v320
        %886 = vmatprep.subr.mxu0 %v325
        %887 = vmatpush1.msra.mxu0 %v324
        %888 = vmatprep.subr.mxu0 %v329
        %889 = vmatpush1.msra.mxu0 %v328
        %890 = vmatprep.subr.mxu0 %v333
        %891 = vmatpush1.msra.mxu0 %v332
        %892 = vmatprep.subr.mxu0 %v337
        %893 = vmatpush1.msra.mxu0 %v336
        %894 = vmatprep.subr.mxu0 %v341
        %895 = vmatpush1.msra.mxu0 %v340
        %896 = vmatprep.subr.mxu0 %v345
        %897 = vmatpush1.msra.mxu0 %v344
        %898 = vmatprep.subr.mxu0 %v349
        %899 = vmatpush1.msra.mxu0 %v348
        %900 = vmatprep.subr.mxu0 %v353
        %901 = vmatpush1.msra.mxu0 %v352
        %902 = vmatprep.subr.mxu0 %v357
        %903 = vmatpush1.msra.mxu0 %v356
        %904 = vmatprep.subr.mxu0 %v361
        %905 = vmatpush1.msra.mxu0 %v360
        %906 = vmatprep.subr.mxu0 %v365
        %907 = vmatpush1.msra.mxu0 %v364
        %908 = vmatprep.subr.mxu0 %v369
        %909 = vmatpush1.msra.mxu0 %v368
        %910 = vmatprep.subr.mxu0 %v373
        %911 = vmatpush1.msra.mxu0 %v372
        %912 = vmatprep.subr.mxu0 %v377
        %913 = vmatpush1.msra.mxu0 %v376
        %914 = vmatprep.subr.mxu0 %v381
        %915 = vmatpush1.msra.mxu0 %v380
        %916 = vmatprep.subr.mxu0 %v385
        %917 = vmatpush1.msra.mxu0 %v384
        %918 = vmatprep.subr.mxu0 %v389
        %919 = vmatpush1.msra.mxu0 %v388
        %920 = vmatprep.subr.mxu0 %v393
        %921 = vmatpush1.msra.mxu0 %v392
        %922 = vmatprep.subr.mxu0 %v397
        %923 = vmatpush1.msra.mxu0 %v396
        %924 = vmatprep.subr.mxu0 %v401
        %925 = vmatpush1.msra.mxu0 %v400
        %926 = vmatprep.subr.mxu0 %v405
        %927 = vmatpush1.msra.mxu0 %v404
        %928 = vmatprep.subr.mxu0 %v409
        %929 = vmatpush1.msra.mxu0 %v408
        %930 = vmatprep.subr.mxu0 %v413
        %931 = vmatpush1.msra.mxu0 %v412
        %932 = vmatprep.subr.mxu0 %v417
        %933 = vmatpush1.msra.mxu0 %v416
        %934 = vmatprep.subr.mxu0 %v421
        %935 = vmatpush1.msra.mxu0 %v420
        %936 = vmatprep.subr.mxu0 %v425
        %937 = vmatpush1.msra.mxu0 %v424
        %938 = vmatprep.subr.mxu0 %v429
        %939 = vmatpush1.msra.mxu0 %v428
        %940 = vmatprep.subr.mxu0 %v433
        %941 = vmatpush1.msra.mxu0 %v432
        %942 = vmatprep.subr.mxu0 %v437
        %943 = vmatpush1.msra.mxu0 %v436
        %944 = vmatprep.mubr.f32.mxu0 %v806
        %945 = vmatmul.mubr.f32.gmra.mrb[0].mxu0 %v879
        %v946 = vpop.f32.mrb[0].mxu0
        %v947 = vadd.f32 %v538, %v946
        %v948 = vpop.f32.mrb[0].mxu0
        %v949 = vadd.f32 %v542, %v948
        %950 = vdwg.mxu0
        %951 = vmatprep.subr.mxu0 %v315
        %952 = vmatpush1.msra.mxu0 %v314
        %953 = vmatprep.subr.mxu0 %v319
        %954 = vmatpush1.msra.mxu0 %v318
        %955 = vmatprep.subr.mxu0 %v323
        %956 = vmatpush1.msra.mxu0 %v322
        %957 = vmatprep.subr.mxu0 %v327
        %958 = vmatpush1.msra.mxu0 %v326
        %959 = vmatprep.subr.mxu0 %v331
        %960 = vmatpush1.msra.mxu0 %v330
        %961 = vmatprep.subr.mxu0 %v335
        %962 = vmatpush1.msra.mxu0 %v334
        %963 = vmatprep.subr.mxu0 %v339
        %964 = vmatpush1.msra.mxu0 %v338
        %965 = vmatprep.subr.mxu0 %v343
        %966 = vmatpush1.msra.mxu0 %v342
        %967 = vmatprep.subr.mxu0 %v347
        %968 = vmatpush1.msra.mxu0 %v346
        %969 = vmatprep.subr.mxu0 %v351
        %970 = vmatpush1.msra.mxu0 %v350
        %971 = vmatprep.subr.mxu0 %v355
        %972 = vmatpush1.msra.mxu0 %v354
        %973 = vmatprep.subr.mxu0 %v359
        %974 = vmatpush1.msra.mxu0 %v358
        %975 = vmatprep.subr.mxu0 %v363
        %976 = vmatpush1.msra.mxu0 %v362
        %977 = vmatprep.subr.mxu0 %v367
        %978 = vmatpush1.msra.mxu0 %v366
        %979 = vmatprep.subr.mxu0 %v371
        %980 = vmatpush1.msra.mxu0 %v370
        %981 = vmatprep.subr.mxu0 %v375
        %982 = vmatpush1.msra.mxu0 %v374
        %983 = vmatprep.subr.mxu0 %v379
        %984 = vmatpush1.msra.mxu0 %v378
        %985 = vmatprep.subr.mxu0 %v383
        %986 = vmatpush1.msra.mxu0 %v382
        %987 = vmatprep.subr.mxu0 %v387
        %988 = vmatpush1.msra.mxu0 %v386
        %989 = vmatprep.subr.mxu0 %v391
        %990 = vmatpush1.msra.mxu0 %v390
        %991 = vmatprep.subr.mxu0 %v395
        %992 = vmatpush1.msra.mxu0 %v394
        %993 = vmatprep.subr.mxu0 %v399
        %994 = vmatpush1.msra.mxu0 %v398
        %995 = vmatprep.subr.mxu0 %v403
        %996 = vmatpush1.msra.mxu0 %v402
        %997 = vmatprep.subr.mxu0 %v407
        %998 = vmatpush1.msra.mxu0 %v406
        %999 = vmatprep.subr.mxu0 %v411
        %1000 = vmatpush1.msra.mxu0 %v410
        %1001 = vmatprep.subr.mxu0 %v415
        %1002 = vmatpush1.msra.mxu0 %v414
        %1003 = vmatprep.subr.mxu0 %v419
        %1004 = vmatpush1.msra.mxu0 %v418
        %1005 = vmatprep.subr.mxu0 %v423
        %1006 = vmatpush1.msra.mxu0 %v422
        %1007 = vmatprep.subr.mxu0 %v427
        %1008 = vmatpush1.msra.mxu0 %v426
        %1009 = vmatprep.subr.mxu0 %v431
        %1010 = vmatpush1.msra.mxu0 %v430
        %1011 = vmatprep.subr.mxu0 %v435
        %1012 = vmatpush1.msra.mxu0 %v434
        %1013 = vmatprep.subr.mxu0 %v439
        %1014 = vmatpush1.msra.mxu0 %v438
        %1015 = vmatprep.mubr.f32.mxu0 %v806
        %1016 = vmatmul.mubr.f32.gmra.mrb[0].mxu0 %v879
        %v1017 = vpop.f32.mrb[0].mxu0
        %v1018 = vadd.f32 %v546, %v1017
        %v1019 = vpop.f32.mrb[0].mxu0
        %v1020 = vadd.f32 %v550, %v1019
        %1021 = vdwg.mxu0
        %v1022 = vxor.u32 %v947, 2147483648
        %v1023 = vmul.f32 %v1022, 1.442695
        %v1024 = vpow.pop %v1023
        %v1025 = vadd.f32 %v1024, 1.0
        %v1026 = vrcp.pop %v1025
        %v1027 = vmul.f32 1.0, %v1026
        %v1028 = vxor.u32 %v949, 2147483648
        %v1029 = vmul.f32 %v1028, 1.442695
        %v1030 = vpow.pop %v1029
        %v1031 = vadd.f32 %v1030, 1.0
        %v1032 = vrcp.pop %v1031
        %v1033 = vmul.f32 1.0, %v1032
        %v1034 = vmul.f32 %v1027, %v1020
        %v1035 = vadd.f32 %v1018, %v1034
        %v1036 = vtanh.pop %v1035
        %v1037 = vsub.f32 1.0, %v1033
        %v1038 = vmul.f32 %v1037, %v1036
        %v1039 = vmul.f32 %v1033, %v806
        %v1040 = vadd.f32 %v1038, %v1039
        %1041 = vmatprep.subr.mxu0 0.0
        %1042 = vmatpush1.msra.mxu0 %v440
        %1043 = vmatprep.subr.mxu0 0.0
        %1044 = vmatpush1.msra.mxu0 %v441
        %1045 = vmatprep.subr.mxu0 0.0
        %1046 = vmatpush1.msra.mxu0 %v442
        %1047 = vmatprep.subr.mxu0 0.0
        %1048 = vmatpush1.msra.mxu0 %v443
        %1049 = vmatprep.subr.mxu0 0.0
        %1050 = vmatpush1.msra.mxu0 %v444
        %1051 = vmatprep.subr.mxu0 0.0
        %1052 = vmatpush1.msra.mxu0 %v445
        %1053 = vmatprep.subr.mxu0 0.0
        %1054 = vmatpush1.msra.mxu0 %v446
        %1055 = vmatprep.subr.mxu0 0.0
        %1056 = vmatpush1.msra.mxu0 %v447
        %1057 = vmatprep.subr.mxu0 0.0
        %1058 = vmatpush1.msra.mxu0 %v448
        %1059 = vmatprep.subr.mxu0 0.0
        %1060 = vmatpush1.msra.mxu0 %v449
        %1061 = vmatprep.subr.mxu0 0.0
        %1062 = vmatpush1.msra.mxu0 %v450
        %1063 = vmatprep.subr.mxu0 0.0
        %1064 = vmatpush1.msra.mxu0 %v451
        %1065 = vmatprep.subr.mxu0 0.0
        %1066 = vmatpush1.msra.mxu0 %v452
        %1067 = vmatprep.subr.mxu0 0.0
        %1068 = vmatpush1.msra.mxu0 %v453
        %1069 = vmatprep.subr.mxu0 0.0
        %1070 = vmatpush1.msra.mxu0 %v454
        %1071 = vmatprep.subr.mxu0 0.0
        %1072 = vmatpush1.msra.mxu0 %v455
        %1073 = vmatprep.subr.mxu0 0.0
        %1074 = vmatpush1.msra.mxu0 0.0
        %1075 = vmatprep.subr.mxu0 0.0
        %1076 = vmatpush1.msra.mxu0 0.0
        %1077 = vmatprep.subr.mxu0 0.0
        %1078 = vmatpush1.msra.mxu0 0.0
        %1079 = vmatprep.subr.mxu0 0.0
        %1080 = vmatpush1.msra.mxu0 0.0
        %1081 = vmatprep.subr.mxu0 0.0
        %1082 = vmatpush1.msra.mxu0 0.0
        %1083 = vmatprep.subr.mxu0 0.0
        %1084 = vmatpush1.msra.mxu0 0.0
        %1085 = vmatprep.subr.mxu0 0.0
        %1086 = vmatpush1.msra.mxu0 0.0
        %1087 = vmatprep.subr.mxu0 0.0
        %1088 = vmatpush1.msra.mxu0 0.0
        %1089 = vmatprep.subr.mxu0 0.0
        %1090 = vmatpush1.msra.mxu0 0.0
        %1091 = vmatprep.subr.mxu0 0.0
        %1092 = vmatpush1.msra.mxu0 0.0
        %1093 = vmatprep.subr.mxu0 0.0
        %1094 = vmatpush1.msra.mxu0 0.0
        %1095 = vmatprep.subr.mxu0 0.0
        %1096 = vmatpush1.msra.mxu0 0.0
        %1097 = vmatprep.subr.mxu0 0.0
        %1098 = vmatpush1.msra.mxu0 0.0
        %1099 = vmatprep.subr.mxu0 0.0
        %1100 = vmatpush1.msra.mxu0 0.0
        %1101 = vmatprep.subr.mxu0 0.0
        %1102 = vmatpush1.msra.mxu0 0.0
        %1103 = vmatprep.subr.mxu0 0.0
        %1104 = vmatpush1.msra.mxu0 0.0
        %1105 = vmatprep.mubr.f32.mxu0 0.0
        %1106 = vmatmul.mubr.f32.gmra.mrb[0].mxu0 %v1040
        %v1107 = vpop.f32.mrb[0].mxu0
        %v1108 = vadd.f32 %v459, %v1107
        %v1109 = vpop.f32.mrb[0].mxu0
        %1110 = vdwg.mxu0
        %s1111 = scalar_lea.vmem %s282, 8
        %v1112 = vld [vmem:[%s1111] sm:$0xff]
        %vm1113 = vcmp.eq.f32.partialorder %v1112, 0.0
        %v1114 = vsel %vm1113, -1e+10, %v1108
        %1115 = vmax.xlane.f32.xlu0 %v1114
        %v1116 = vpop.xlane.xlu0 %1115
        %v1117 = vsub.f32 %v1114, %v1116
        %v1118 = vmul.f32 %v1117, 1.442695
        %v1119 = vpow.pop %v1118
        %1120 = vadd.xlane.f32.xlu0 %v1119
        %v1121 = vpop.xlane.xlu0 %1120
        %v1122 = vrcp.pop %v1121
        %v1123 = vmul.f32 %v1119, %v1122
        %s1124 = scalar_lea.vmem %s288, 8
        %1125 = vst [vmem:[%s1124] sm:$0xff] %v1123
        %p1126 = scmp.lt.s32.totalorder %s805, 8
        %s1127 = scalar_select %p1126, 1, 0
        %v1128 = vstv %s1127
        %vm1129 = vcmp.eq.s32.totalorder %v1128, 1
        %v1130 = vsel %vm1129, %v1040, %v806
        %1131 = vst [vmem:[%s6] sm:$0xff] %v1130
        %s1132 = sadd.s32 %s460, 2
        %v1133 = vld [vmem:[%s6] sm:$0xff]
        %s1134 = scalar_lea.vmem %s276, 16
        %v1135 = vld [vmem:[%s1134] sm:$0xff]
        %1136 = vmatprep.subr.mxu0 0.0
        %1137 = vmatpush1.msra.mxu0 %v296
        %1138 = vmatprep.subr.mxu0 0.0
        %1139 = vmatpush1.msra.mxu0 %v297
        %1140 = vmatprep.subr.mxu0 0.0
        %1141 = vmatpush1.msra.mxu0 %v298
        %1142 = vmatprep.subr.mxu0 0.0
        %1143 = vmatpush1.msra.mxu0 %v299
        %1144 = vmatprep.subr.mxu0 0.0
        %1145 = vmatpush1.msra.mxu0 %v300
        %1146 = vmatprep.subr.mxu0 0.0
        %1147 = vmatpush1.msra.mxu0 %v301
        %1148 = vmatprep.subr.mxu0 0.0
        %1149 = vmatpush1.msra.mxu0 %v302
        %1150 = vmatprep.subr.mxu0 0.0
        %1151 = vmatpush1.msra.mxu0 %v303
        %1152 = vmatprep.subr.mxu0 0.0
        %1153 = vmatpush1.msra.mxu0 %v304
        %1154 = vmatprep.subr.mxu0 0.0
        %1155 = vmatpush1.msra.mxu0 %v305
        %1156 = vmatprep.subr.mxu0 0.0
        %1157 = vmatpush1.msra.mxu0 %v306
        %1158 = vmatprep.subr.mxu0 0.0
        %1159 = vmatpush1.msra.mxu0 %v307
        %1160 = vmatprep.subr.mxu0 0.0
        %1161 = vmatpush1.msra.mxu0 %v308
        %1162 = vmatprep.subr.mxu0 0.0
        %1163 = vmatpush1.msra.mxu0 %v309
        %1164 = vmatprep.subr.mxu0 0.0
        %1165 = vmatpush1.msra.mxu0 %v310
        %1166 = vmatprep.subr.mxu0 0.0
        %1167 = vmatpush1.msra.mxu0 %v311
        %1168 = vmatprep.subr.mxu0 0.0
        %1169 = vmatpush1.msra.mxu0 0.0
        %1170 = vmatprep.subr.mxu0 0.0
        %1171 = vmatpush1.msra.mxu0 0.0
        %1172 = vmatprep.subr.mxu0 0.0
        %1173 = vmatpush1.msra.mxu0 0.0
        %1174 = vmatprep.subr.mxu0 0.0
        %1175 = vmatpush1.msra.mxu0 0.0
        %1176 = vmatprep.subr.mxu0 0.0
        %1177 = vmatpush1.msra.mxu0 0.0
        %1178 = vmatprep.subr.mxu0 0.0
        %1179 = vmatpush1.msra.mxu0 0.0
        %1180 = vmatprep.subr.mxu0 0.0
        %1181 = vmatpush1.msra.mxu0 0.0
        %1182 = vmatprep.subr.mxu0 0.0
        %1183 = vmatpush1.msra.mxu0 0.0
        %1184 = vmatprep.subr.mxu0 0.0
        %1185 = vmatpush1.msra.mxu0 0.0
        %1186 = vmatprep.subr.mxu0 0.0
        %1187 = vmatpush1.msra.mxu0 0.0
        %1188 = vmatprep.subr.mxu0 0.0
        %1189 = vmatpush1.msra.mxu0 0.0
        %1190 = vmatprep.subr.mxu0 0.0
        %1191 = vmatpush1.msra.mxu0 0.0
        %1192 = vmatprep.subr.mxu0 0.0
        %1193 = vmatpush1.msra.mxu0 0.0
        %1194 = vmatprep.subr.mxu0 0.0
        %1195 = vmatpush1.msra.mxu0 0.0
        %1196 = vmatprep.subr.mxu0 0.0
        %1197 = vmatpush1.msra.mxu0 0.0
        %1198 = vmatprep.subr.mxu0 0.0
        %1199 = vmatpush1.msra.mxu0 0.0
        %1200 = vmatprep.mubr.f32.mxu0 0.0
        %1201 = vmatmul.mubr.f32.gmra.mrb[0].mxu0 %v1135
        %v1202 = vpop.f32.mrb[0].mxu0
        %v1203 = vadd.f32 %v456, %v1202
        %v1204 = vpop.f32.mrb[0].mxu0
        %1205 = vdwg.mxu0
        %v1206 = vmax.f32 %v1203, 0.0
        %1207 = vmatprep.subr.mxu0 %v313
        %1208 = vmatpush1.msra.mxu0 %v312
        %1209 = vmatprep.subr.mxu0 %v317
        %1210 = vmatpush1.msra.mxu0 %v316
        %1211 = vmatprep.subr.mxu0 %v321
        %1212 = vmatpush1.msra.mxu0 %v320
        %1213 = vmatprep.subr.mxu0 %v325
        %1214 = vmatpush1.msra.mxu0 %v324
        %1215 = vmatprep.subr.mxu0 %v329
        %1216 = vmatpush1.msra.mxu0 %v328
        %1217 = vmatprep.subr.mxu0 %v333
        %1218 = vmatpush1.msra.mxu0 %v332
        %1219 = vmatprep.subr.mxu0 %v337
        %1220 = vmatpush1.msra.mxu0 %v336
        %1221 = vmatprep.subr.mxu0 %v341
        %1222 = vmatpush1.msra.mxu0 %v340
        %1223 = vmatprep.subr.mxu0 %v345
        %1224 = vmatpush1.msra.mxu0 %v344
        %1225 = vmatprep.subr.mxu0 %v349
        %1226 = vmatpush1.msra.mxu0 %v348
        %1227 = vmatprep.subr.mxu0 %v353
        %1228 = vmatpush1.msra.mxu0 %v352
        %1229 = vmatprep.subr.mxu0 %v357
        %1230 = vmatpush1.msra.mxu0 %v356
        %1231 = vmatprep.subr.mxu0 %v361
        %1232 = vmatpush1.msra.mxu0 %v360
        %1233 = vmatprep.subr.mxu0 %v365
        %1234 = vmatpush1.msra.mxu0 %v364
        %1235 = vmatprep.subr.mxu0 %v369
        %1236 = vmatpush1.msra.mxu0 %v368
        %1237 = vmatprep.subr.mxu0 %v373
        %1238 = vmatpush1.msra.mxu0 %v372
        %1239 = vmatprep.subr.mxu0 %v377
        %1240 = vmatpush1.msra.mxu0 %v376
        %1241 = vmatprep.subr.mxu0 %v381
        %1242 = vmatpush1.msra.mxu0 %v380
        %1243 = vmatprep.subr.mxu0 %v385
        %1244 = vmatpush1.msra.mxu0 %v384
        %1245 = vmatprep.subr.mxu0 %v389
        %1246 = vmatpush1.msra.mxu0 %v388
        %1247 = vmatprep.subr.mxu0 %v393
        %1248 = vmatpush1.msra.mxu0 %v392
        %1249 = vmatprep.subr.mxu0 %v397
        %1250 = vmatpush1.msra.mxu0 %v396
        %1251 = vmatprep.subr.mxu0 %v401
        %1252 = vmatpush1.msra.mxu0 %v400
        %1253 = vmatprep.subr.mxu0 %v405
        %1254 = vmatpush1.msra.mxu0 %v404
        %1255 = vmatprep.subr.mxu0 %v409
        %1256 = vmatpush1.msra.mxu0 %v408
        %1257 = vmatprep.subr.mxu0 %v413
        %1258 = vmatpush1.msra.mxu0 %v412
        %1259 = vmatprep.subr.mxu0 %v417
        %1260 = vmatpush1.msra.mxu0 %v416
        %1261 = vmatprep.subr.mxu0 %v421
        %1262 = vmatpush1.msra.mxu0 %v420
        %1263 = vmatprep.subr.mxu0 %v425
        %1264 = vmatpush1.msra.mxu0 %v424
        %1265 = vmatprep.subr.mxu0 %v429
        %1266 = vmatpush1.msra.mxu0 %v428
        %1267 = vmatprep.subr.mxu0 %v433
        %1268 = vmatpush1.msra.mxu0 %v432
        %1269 = vmatprep.subr.mxu0 %v437
        %1270 = vmatpush1.msra.mxu0 %v436
        %1271 = vmatprep.mubr.f32.mxu0 %v1133
        %1272 = vmatmul.mubr.f32.gmra.mrb[0].mxu0 %v1206
        %v1273 = vpop.f32.mrb[0].mxu0
        %v1274 = vadd.f32 %v538, %v1273
        %v1275 = vpop.f32.mrb[0].mxu0
        %v1276 = vadd.f32 %v542, %v1275
        %1277 = vdwg.mxu0
        %1278 = vmatprep.subr.mxu0 %v315
        %1279 = vmatpush1.msra.mxu0 %v314
        %1280 = vmatprep.subr.mxu0 %v319
        %1281 = vmatpush1.msra.mxu0 %v318
        %1282 = vmatprep.subr.mxu0 %v323
        %1283 = vmatpush1.msra.mxu0 %v322
        %1284 = vmatprep.subr.mxu0 %v327
        %1285 = vmatpush1.msra.mxu0 %v326
        %1286 = vmatprep.subr.mxu0 %v331
        %1287 = vmatpush1.msra.mxu0 %v330
        %1288 = vmatprep.subr.mxu0 %v335
        %1289 = vmatpush1.msra.mxu0 %v334
        %1290 = vmatprep.subr.mxu0 %v339
        %1291 = vmatpush1.msra.mxu0 %v338
        %1292 = vmatprep.subr.mxu0 %v343
        %1293 = vmatpush1.msra.mxu0 %v342
        %1294 = vmatprep.subr.mxu0 %v347
        %1295 = vmatpush1.msra.mxu0 %v346
        %1296 = vmatprep.subr.mxu0 %v351
        %1297 = vmatpush1.msra.mxu0 %v350
        %1298 = vmatprep.subr.mxu0 %v355
        %1299 = vmatpush1.msra.mxu0 %v354
        %1300 = vmatprep.subr.mxu0 %v359
        %1301 = vmatpush1.msra.mxu0 %v358
        %1302 = vmatprep.subr.mxu0 %v363
        %1303 = vmatpush1.msra.mxu0 %v362
        %1304 = vmatprep.subr.mxu0 %v367
        %1305 = vmatpush1.msra.mxu0 %v366
        %1306 = vmatprep.subr.mxu0 %v371
        %1307 = vmatpush1.msra.mxu0 %v370
        %1308 = vmatprep.subr.mxu0 %v375
        %1309 = vmatpush1.msra.mxu0 %v374
        %1310 = vmatprep.subr.mxu0 %v379
        %1311 = vmatpush1.msra.mxu0 %v378
        %1312 = vmatprep.subr.mxu0 %v383
        %1313 = vmatpush1.msra.mxu0 %v382
        %1314 = vmatprep.subr.mxu0 %v387
        %1315 = vmatpush1.msra.mxu0 %v386
        %1316 = vmatprep.subr.mxu0 %v391
        %1317 = vmatpush1.msra.mxu0 %v390
        %1318 = vmatprep.subr.mxu0 %v395
        %1319 = vmatpush1.msra.mxu0 %v394
        %1320 = vmatprep.subr.mxu0 %v399
        %1321 = vmatpush1.msra.mxu0 %v398
        %1322 = vmatprep.subr.mxu0 %v403
        %1323 = vmatpush1.msra.mxu0 %v402
        %1324 = vmatprep.subr.mxu0 %v407
        %1325 = vmatpush1.msra.mxu0 %v406
        %1326 = vmatprep.subr.mxu0 %v411
        %1327 = vmatpush1.msra.mxu0 %v410
        %1328 = vmatprep.subr.mxu0 %v415
        %1329 = vmatpush1.msra.mxu0 %v414
        %1330 = vmatprep.subr.mxu0 %v419
        %1331 = vmatpush1.msra.mxu0 %v418
        %1332 = vmatprep.subr.mxu0 %v423
        %1333 = vmatpush1.msra.mxu0 %v422
        %1334 = vmatprep.subr.mxu0 %v427
        %1335 = vmatpush1.msra.mxu0 %v426
        %1336 = vmatprep.subr.mxu0 %v431
        %1337 = vmatpush1.msra.mxu0 %v430
        %1338 = vmatprep.subr.mxu0 %v435
        %1339 = vmatpush1.msra.mxu0 %v434
        %1340 = vmatprep.subr.mxu0 %v439
        %1341 = vmatpush1.msra.mxu0 %v438
        %1342 = vmatprep.mubr.f32.mxu0 %v1133
        %1343 = vmatmul.mubr.f32.gmra.mrb[0].mxu0 %v1206
        %v1344 = vpop.f32.mrb[0].mxu0
        %v1345 = vadd.f32 %v546, %v1344
        %v1346 = vpop.f32.mrb[0].mxu0
        %v1347 = vadd.f32 %v550, %v1346
        %1348 = vdwg.mxu0
        %v1349 = vxor.u32 %v1274, 2147483648
        %v1350 = vmul.f32 %v1349, 1.442695
        %v1351 = vpow.pop %v1350
        %v1352 = vadd.f32 %v1351, 1.0
        %v1353 = vrcp.pop %v1352
        %v1354 = vmul.f32 1.0, %v1353
        %v1355 = vxor.u32 %v1276, 2147483648
        %v1356 = vmul.f32 %v1355, 1.442695
        %v1357 = vpow.pop %v1356
        %v1358 = vadd.f32 %v1357, 1.0
        %v1359 = vrcp.pop %v1358
        %v1360 = vmul.f32 1.0, %v1359
        %v1361 = vmul.f32 %v1354, %v1347
        %v1362 = vadd.f32 %v1345, %v1361
        %v1363 = vtanh.pop %v1362
        %v1364 = vsub.f32 1.0, %v1360
        %v1365 = vmul.f32 %v1364, %v1363
        %v1366 = vmul.f32 %v1360, %v1133
        %v1367 = vadd.f32 %v1365, %v1366
        %1368 = vmatprep.subr.mxu0 0.0
        %1369 = vmatpush1.msra.mxu0 %v440
        %1370 = vmatprep.subr.mxu0 0.0
        %1371 = vmatpush1.msra.mxu0 %v441
        %1372 = vmatprep.subr.mxu0 0.0
        %1373 = vmatpush1.msra.mxu0 %v442
        %1374 = vmatprep.subr.mxu0 0.0
        %1375 = vmatpush1.msra.mxu0 %v443
        %1376 = vmatprep.subr.mxu0 0.0
        %1377 = vmatpush1.msra.mxu0 %v444
        %1378 = vmatprep.subr.mxu0 0.0
        %1379 = vmatpush1.msra.mxu0 %v445
        %1380 = vmatprep.subr.mxu0 0.0
        %1381 = vmatpush1.msra.mxu0 %v446
        %1382 = vmatprep.subr.mxu0 0.0
        %1383 = vmatpush1.msra.mxu0 %v447
        %1384 = vmatprep.subr.mxu0 0.0
        %1385 = vmatpush1.msra.mxu0 %v448
        %1386 = vmatprep.subr.mxu0 0.0
        %1387 = vmatpush1.msra.mxu0 %v449
        %1388 = vmatprep.subr.mxu0 0.0
        %1389 = vmatpush1.msra.mxu0 %v450
        %1390 = vmatprep.subr.mxu0 0.0
        %1391 = vmatpush1.msra.mxu0 %v451
        %1392 = vmatprep.subr.mxu0 0.0
        %1393 = vmatpush1.msra.mxu0 %v452
        %1394 = vmatprep.subr.mxu0 0.0
        %1395 = vmatpush1.msra.mxu0 %v453
        %1396 = vmatprep.subr.mxu0 0.0
        %1397 = vmatpush1.msra.mxu0 %v454
        %1398 = vmatprep.subr.mxu0 0.0
        %1399 = vmatpush1.msra.mxu0 %v455
        %1400 = vmatprep.subr.mxu0 0.0
        %1401 = vmatpush1.msra.mxu0 0.0
        %1402 = vmatprep.subr.mxu0 0.0
        %1403 = vmatpush1.msra.mxu0 0.0
        %1404 = vmatprep.subr.mxu0 0.0
        %1405 = vmatpush1.msra.mxu0 0.0
        %1406 = vmatprep.subr.mxu0 0.0
        %1407 = vmatpush1.msra.mxu0 0.0
        %1408 = vmatprep.subr.mxu0 0.0
        %1409 = vmatpush1.msra.mxu0 0.0
        %1410 = vmatprep.subr.mxu0 0.0
        %1411 = vmatpush1.msra.mxu0 0.0
        %1412 = vmatprep.subr.mxu0 0.0
        %1413 = vmatpush1.msra.mxu0 0.0
        %1414 = vmatprep.subr.mxu0 0.0
        %1415 = vmatpush1.msra.mxu0 0.0
        %1416 = vmatprep.subr.mxu0 0.0
        %1417 = vmatpush1.msra.mxu0 0.0
        %1418 = vmatprep.subr.mxu0 0.0
        %1419 = vmatpush1.msra.mxu0 0.0
        %1420 = vmatprep.subr.mxu0 0.0
        %1421 = vmatpush1.msra.mxu0 0.0
        %1422 = vmatprep.subr.mxu0 0.0
        %1423 = vmatpush1.msra.mxu0 0.0
        %1424 = vmatprep.subr.mxu0 0.0
        %1425 = vmatpush1.msra.mxu0 0.0
        %1426 = vmatprep.subr.mxu0 0.0
        %1427 = vmatpush1.msra.mxu0 0.0
        %1428 = vmatprep.subr.mxu0 0.0
        %1429 = vmatpush1.msra.mxu0 0.0
        %1430 = vmatprep.subr.mxu0 0.0
        %1431 = vmatpush1.msra.mxu0 0.0
        %1432 = vmatprep.mubr.f32.mxu0 0.0
        %1433 = vmatmul.mubr.f32.gmra.mrb[0].mxu0 %v1367
        %v1434 = vpop.f32.mrb[0].mxu0
        %v1435 = vadd.f32 %v459, %v1434
        %v1436 = vpop.f32.mrb[0].mxu0
        %1437 = vdwg.mxu0
        %s1438 = scalar_lea.vmem %s282, 16
        %v1439 = vld [vmem:[%s1438] sm:$0xff]
        %vm1440 = vcmp.eq.f32.partialorder %v1439, 0.0
        %v1441 = vsel %vm1440, -1e+10, %v1435
        %1442 = vmax.xlane.f32.xlu0 %v1441
        %v1443 = vpop.xlane.xlu0 %1442
        %v1444 = vsub.f32 %v1441, %v1443
        %v1445 = vmul.f32 %v1444, 1.442695
        %v1446 = vpow.pop %v1445
        %1447 = vadd.xlane.f32.xlu0 %v1446
        %v1448 = vpop.xlane.xlu0 %1447
        %v1449 = vrcp.pop %v1448
        %v1450 = vmul.f32 %v1446, %v1449
        %s1451 = scalar_lea.vmem %s288, 16
        %1452 = vst [vmem:[%s1451] sm:$0xff] %v1450
        %p1453 = scmp.lt.s32.totalorder %s1132, 8
        %s1454 = scalar_select %p1453, 1, 0
        %v1455 = vstv %s1454
        %vm1456 = vcmp.eq.s32.totalorder %v1455, 1
        %v1457 = vsel %vm1456, %v1367, %v1133
        %1458 = vst [vmem:[%s6] sm:$0xff] %v1457
        %s1459 = smul.u32 3, %s19
        %p1460 = scmp.lt.s32.totalorder %s1459, 8
        %s1461 = scalar_select %p1460, %s1459, 8
        %s1462 = smul.addr %s1461, 8
        %s1463 = scalar_lea.vmem %s5, %s1462
        // Predicated region
        $region49: #{actor_rollout.1} parent=39 // pred_check
          %p1464 = pneg %p152
        $region50: #{actor_rollout.1} parent=39 // pred_check_branch
          %1466 = sbr.rel (%p1464) target = $region52
        $region51: #{actor_rollout.1} parent=39 // pred_region
          %s1467 = smul.u32 3, %s19
        $region52: #{actor_rollout.1} parent=39 // pred_fallthru
          _
        // Predicated region
        $region53: #{actor_rollout.1} parent=39 // pred_check
          %p1468 = pneg %p173
        $region54: #{actor_rollout.1} parent=39 // pred_check_branch
          %1470 = sbr.rel (%p1468) target = $region56
        $region55: #{actor_rollout.1} parent=39 // pred_region
          _
        $region56: #{actor_rollout.1} parent=39 // pred_fallthru
          _
        // Predicated region
        $region57: #{actor_rollout.1} parent=39 // pred_check
          %p1471 = pneg %p173
        $region58: #{actor_rollout.1} parent=39 // pred_check_branch
          %1473 = sbr.rel (%p1471) target = $region60
        $region59: #{actor_rollout.1} parent=39 // pred_region
          _
        $region60: #{actor_rollout.1} parent=39 // pred_fallthru
          _
      $region40: #{actor_rollout.1} parent=5 // pred_fallthru
        _
      %p1474 = scmp.le.s32.totalorder 2, %s14
      // Predicated region
      $region61: #{actor_rollout.1} parent=5 // pred_check
        %p1475 = pneg %p1474
      $region62: #{actor_rollout.1} parent=5 // pred_check_branch
        %1477 = sbr.rel (%p1475) target = $region64
      $region63: #{actor_rollout.1} parent=5 // pred_region
        %s1478 = ssub.s32 %s14, 2
        // Predicated region
        $region65: #{actor_rollout.1} parent=63 // pred_check
          %p1479 = pneg %p158
        $region66: #{actor_rollout.1} parent=63 // pred_check_branch
          %1481 = sbr.rel (%p1479) target = $region68
        $region67: #{actor_rollout.1} parent=63 // pred_region
          %s1482 = smul.u32 3, %s20
          %p1483 = scmp.lt.s32.totalorder %s1482, 8
          %s1484 = scalar_select %p1483, %s1482, 8
          %s1485 = smul.addr %s1484, 8
          %s1486 = scalar_lea.vmem %s5, %s1485
        $region68: #{actor_rollout.1} parent=63 // pred_fallthru
          _
      $region64: #{actor_rollout.1} parent=5 // pred_fallthru
        _
    $region6: #{actor_rollout.1} parent=1 // loop_footer
      %s18 = sadd.s32 1, %s14
    $region7: #{actor_rollout.1} parent=1 // loop_footer_branch
      %13 = sbr.rel target = $region3
    $region8: #{actor_rollout.1} parent=1 // loop_exit
      _
    %1487 = vsyncpa [#allocation3], 1
    %s1488 = scalar_lea.sflag [#allocation3], 1
    %1489 = vsyncpa %s1488, 1

</llo_original>
